<compile_context>
chip_gen: v7x
topology: tpu7x:2x2x1
jax: 0.10.0
libtpu: 0.0.40
codegen_flags: <defaults>
</compile_context>

<pallas_src>
import jax
import jax.numpy as jnp
from jax.experimental import pallas as pl
from jax.experimental.pallas import tpu as pltpu

H1 = 400          # fc1 / fc3 width (logical)
H2 = 300          # fc2 / fc4 width (logical)
H1P = 512         # padded branch width  -> Q2 branch starts at lane 512 (aligned)
H2P = 384         # padded layer-2 width -> lane-aligned head blocks (384 = 3*128)

B2_OFF = 2 * H1P            # 1024 : fc2 bias offset in the bias slab
B4_OFF = 2 * H1P + H2P      # 1408 : fc4 bias offset
BQ_OFF = 2 * H1P + 2 * H2P  # 1792 : q/q2 head bias offset
B_WIDTH = BQ_OFF + 4        # 1796 : total bias-slab width


# ----------------------------------------------------------------------------
# Kernel: twin-Q critic MLP (single invocation, everything in VMEM)
# ----------------------------------------------------------------------------
def _critic_kernel(x_ref, w13_ref, w24_ref, wq_ref, b_ref, out_ref):

    def leaky(v):
        # F.leaky_relu(v, 0.01) as a single vmax instead of cmp+select
        return jnp.maximum(v, 0.01 * v)

    # in-kernel cast (VPU work hidden under DMA slack; no wrapper astype launch)
    x = x_ref[...].astype(jnp.bfloat16)                     # bf16 [B, in_dim]

    # ---- layer 1: fc1 || fc3 fused; Q2 branch starts at lane 512 (aligned) ----
    h0 = jnp.dot(x, w13_ref[...], preferred_element_type=jnp.float32)
    h0 = leaky(h0 + b_ref[0:1, 0:2 * H1P])                  # f32 [B, 1024]

    h = h0[:, 0:H1P].astype(jnp.bfloat16)                   # Q1 branch (lanes   0:512)
    g = h0[:, H1P:2 * H1P].astype(jnp.bfloat16)             # Q2 branch (lanes 512:1024)

    # ---- layer 2: fc2 / fc4 from one weight slab, lane-aligned column views ----
    h2 = leaky(jnp.dot(h, w24_ref[:, 0:H2P],
                       preferred_element_type=jnp.float32)
               + b_ref[0:1, B2_OFF:B2_OFF + H2P])           # f32 [B, 384]
    g2 = leaky(jnp.dot(g, w24_ref[:, H2P:2 * H2P],
                       preferred_element_type=jnp.float32)
               + b_ref[0:1, B4_OFF:B4_OFF + H2P])           # f32 [B, 384]

    # ---- fused twin heads (block-diagonal wq) -> single contiguous [B,4] store ----
    q = (jnp.dot(h2.astype(jnp.bfloat16), wq_ref[0:H2P, :],
                 preferred_element_type=jnp.float32)
         + jnp.dot(g2.astype(jnp.bfloat16), wq_ref[H2P:2 * H2P, :],
                   preferred_element_type=jnp.float32)
         + b_ref[0:1, BQ_OFF:BQ_OFF + 4])
    out_ref[...] = q                                        # one unmasked store


def critic_forward(x, params):
    """x: [B, state_dim + out_c + out_d + wt_dim] float32 -> (q1, q2), each [B, 2]."""
    B, in_dim = x.shape

    # pad batch to a multiple of 16 (bf16 sublane packing); no-op for B % 16 == 0
    B_pad = -(-B // 16) * 16
    if B_pad != B:
        x = jnp.pad(x, ((0, B_pad - B), (0, 0)))

    args = (x, params["w13"], params["w24"], params["wq"], params["b"])

    flops = 2 * B_pad * (in_dim * 2 * H1P + H1P * 2 * H2P + 2 * H2P * 4)
    bytes_accessed = int(sum(int(a.size) * a.dtype.itemsize for a in args)) + B_pad * 4 * 4

    vmem = pl.BlockSpec(memory_space=pltpu.VMEM)
    q12 = pl.pallas_call(
        _critic_kernel,
        out_shape=jax.ShapeDtypeStruct((B_pad, 4), jnp.float32),
        in_specs=[vmem] * len(args),
        out_specs=vmem,
        cost_estimate=pl.CostEstimate(flops=flops,
                                      transcendentals=0,
                                      bytes_accessed=bytes_accessed),
    )(*args)
    return q12[:B, 0:2], q12[:B, 2:4]


# ----------------------------------------------------------------------------
# Deterministic parameter init (xavier_uniform weights, zero biases),
# packed into padded / fused slabs.  All padding entries are exactly zero.
# ----------------------------------------------------------------------------
def _xavier_uniform(key, fan_in, fan_out, gain=1.0):
    bound = gain * jnp.sqrt(6.0 / (fan_in + fan_out))
    return jax.random.uniform(key, (fan_in, fan_out), jnp.float32, -bound, bound)


def init_critic_params(key, state_dim, number_of_device, wt_dim):
    out_d = number_of_device
    out_c = number_of_device * 2
    in_dim = state_dim + out_c + out_d + wt_dim
    keys = jax.random.split(key, 6)

    w1 = _xavier_uniform(keys[0], in_dim, H1)   # fc1
    w2 = _xavier_uniform(keys[1], H1, H2)       # fc2
    wq1 = _xavier_uniform(keys[2], H2, 2)       # q_head
    w3 = _xavier_uniform(keys[3], in_dim, H1)   # fc3
    w4 = _xavier_uniform(keys[4], H1, H2)       # fc4
    wq2 = _xavier_uniform(keys[5], H2, 2)       # q2_head

    # fc1 || fc3 fused along output axis; Q2 branch placed at lane 512
    w13 = jnp.zeros((in_dim, 2 * H1P), jnp.float32)
    w13 = w13.at[:, 0:H1].set(w1).at[:, H1P:H1P + H1].set(w3)

    # fc2 | fc4 side-by-side: K padded 400->512 (zero rows), N padded 300->384
    w24 = jnp.zeros((H1P, 2 * H2P), jnp.float32)
    w24 = w24.at[0:H1, 0:H2].set(w2).at[0:H1, H2P:H2P + H2].set(w4)

    # twin heads fused block-diagonally -> one contiguous [B, 4] output
    wq = jnp.zeros((2 * H2P, 4), jnp.float32)
    wq = wq.at[0:H2, 0:2].set(wq1).at[H2P:H2P + H2, 2:4].set(wq2)

    # single f32 bias slab: [b1 | pad | b3 | pad | b2 | pad | b4 | pad | bq1 | bq2]
    # (all zero for xavier init, slots kept for loading trained weights)
    b = jnp.zeros((1, B_WIDTH), jnp.float32)

    params = {
        "w13": w13.astype(jnp.bfloat16),
        "w24": w24.astype(jnp.bfloat16),
        "wq":  wq.astype(jnp.bfloat16),
        "b":   b,
    }
    return params, in_dim


# ----------------------------------------------------------------------------
# Pure-JAX f32 reference (uses the same bf16-rounded weights / activations)
# ----------------------------------------------------------------------------
def _ref_forward(x, p):
    def leaky(v):
        return jnp.where(v >= 0, v, 0.01 * v)

    w13 = p["w13"].astype(jnp.float32)
    w24 = p["w24"].astype(jnp.float32)
    wq = p["wq"].astype(jnp.float32)
    b = p["b"]

    w1, w3 = w13[:, 0:H1], w13[:, H1P:H1P + H1]
    w2, w4 = w24[0:H1, 0:H2], w24[0:H1, H2P:H2P + H2]
    wq1, wq2 = wq[0:H2, 0:2], wq[H2P:H2P + H2, 2:4]
    b1, b3 = b[0, 0:H1], b[0, H1P:H1P + H1]
    b2, b4 = b[0, B2_OFF:B2_OFF + H2], b[0, B4_OFF:B4_OFF + H2]
    bq1, bq2 = b[0, BQ_OFF:BQ_OFF + 2], b[0, BQ_OFF + 2:BQ_OFF + 4]

    def r(v):  # emulate bf16 activation rounding at each matmul input
        return v.astype(jnp.bfloat16).astype(jnp.float32)

    xf = r(x)
    h = leaky(xf @ w1 + b1)
    h = leaky(r(h) @ w2 + b2)
    q1 = r(h) @ wq1 + bq1
    g = leaky(xf @ w3 + b3)
    g = leaky(r(g) @ w4 + b4)
    q2 = r(g) @ wq2 + bq2
    return q1, q2


if __name__ == "__main__":
    # Small, forward-consistent shapes (B multiple of 16 -> no batch padding)
    batch = 16
    state_dim = 16
    number_of_server = 2      # unused by forward, kept for signature parity
    number_of_device = 3
    wt_dim = 2
    out_d = number_of_device
    out_c = number_of_device * 2

    key = jax.random.PRNGKey(0)
    kp, ks, kc, kd, kw = jax.random.split(key, 5)

    params, in_dim = init_critic_params(kp, state_dim, number_of_device, wt_dim)

    state = jax.random.normal(ks, (batch, state_dim), jnp.float32)
    action_c = jax.random.uniform(kc, (batch, out_c), jnp.float32)
    # discrete actions are integer-valued but concatenated as floats
    action_d = jax.random.randint(kd, (batch, out_d), 0, number_of_server + 1).astype(jnp.float32)
    w = jax.random.uniform(kw, (batch, wt_dim), jnp.float32)

    # x = cat([state, action_d, action_c, w], dim=1)  (same order as PyTorch forward)
    x = jnp.concatenate([state, action_d, action_c, w], axis=1)
    assert x.shape == (batch, in_dim)

    q1, q2 = critic_forward(x, params)
    jax.block_until_ready((q1, q2))

    # correctness check vs pure-JAX reference (loose tol: bf16 weights/activations)
    q1_ref, q2_ref = _ref_forward(x, params)
    assert q1.shape == (batch, 2) and q2.shape == (batch, 2)
    assert jnp.all(jnp.isfinite(q1)) and jnp.all(jnp.isfinite(q2))
    assert jnp.allclose(q1, q1_ref, atol=5e-2, rtol=5e-2)
    assert jnp.allclose(q2, q2_ref, atol=5e-2, rtol=5e-2)

    print("KERNEL_OK")
</pallas_src>

<mosaic_0001>
module attributes {stable_mosaic.version = 11 : i64} {
  func.func @_critic_kernel(%arg0: memref<16x27xf32, #tpu.memory_space<vmem>>, %arg1: memref<27x1024xbf16, #tpu.memory_space<vmem>>, %arg2: memref<512x768xbf16, #tpu.memory_space<vmem>>, %arg3: memref<768x4xbf16, #tpu.memory_space<vmem>>, %arg4: memref<1x1796xf32, #tpu.memory_space<vmem>>, %arg5: memref<16x4xf32, #tpu.memory_space<vmem>>) attributes {dimension_semantics = [], scalar_prefetch = 0 : i64, scratch_operands = 0 : i64, tpu.core_type = #tpu.core_type<tc>} {
    %c0 = arith.constant 0 : index
    %c0_0 = arith.constant 0 : index
    %0 = vector.load %arg0[%c0, %c0_0] : memref<16x27xf32, #tpu.memory_space<vmem>>, vector<16x27xf32>
    %1 = arith.truncf %0 : vector<16x27xf32> to vector<16x27xbf16>
    %c0_1 = arith.constant 0 : index
    %c0_2 = arith.constant 0 : index
    %2 = vector.load %arg1[%c0_1, %c0_2] : memref<27x1024xbf16, #tpu.memory_space<vmem>>, vector<27x1024xbf16>
    %cst = arith.constant dense<0.000000e+00> : vector<16x1024xf32>
    %3 = tpu.matmul %1, %2, %cst {dimension_numbers = #tpu.dot_dimension_numbers<[1], [0], [0], [1], [0, 0, 1, 1], [], []>} : vector<16x27xbf16>, vector<27x1024xbf16>, vector<16x1024xf32> -> vector<16x1024xf32>
    %c0_3 = arith.constant 0 : index
    %c0_4 = arith.constant 0 : index
    %4 = vector.load %arg4[%c0_3, %c0_4] : memref<1x1796xf32, #tpu.memory_space<vmem>>, vector<1x1024xf32>
    %5 = vector.broadcast %4 : vector<1x1024xf32> to vector<16x1024xf32>
    %6 = arith.addf %3, %5 : vector<16x1024xf32>
    %cst_5 = arith.constant 0.00999999977 : f32
    %7 = vector.broadcast %cst_5 : f32 to vector<16x1024xf32>
    %8 = arith.mulf %7, %6 : vector<16x1024xf32>
    %9 = arith.maximumf %6, %8 : vector<16x1024xf32>
    %10 = vector.extract_strided_slice %9 {offsets = [0, 0], sizes = [16, 512], strides = [1, 1]} : vector<16x1024xf32> to vector<16x512xf32>
    %11 = arith.truncf %10 : vector<16x512xf32> to vector<16x512xbf16>
    %12 = vector.extract_strided_slice %9 {offsets = [0, 512], sizes = [16, 512], strides = [1, 1]} : vector<16x1024xf32> to vector<16x512xf32>
    %13 = arith.truncf %12 : vector<16x512xf32> to vector<16x512xbf16>
    %c0_6 = arith.constant 0 : index
    %c0_7 = arith.constant 0 : index
    %14 = vector.load %arg2[%c0_6, %c0_7] : memref<512x768xbf16, #tpu.memory_space<vmem>>, vector<512x384xbf16>
    %cst_8 = arith.constant dense<0.000000e+00> : vector<16x384xf32>
    %15 = tpu.matmul %11, %14, %cst_8 {dimension_numbers = #tpu.dot_dimension_numbers<[1], [0], [0], [1], [0, 0, 1, 1], [], []>} : vector<16x512xbf16>, vector<512x384xbf16>, vector<16x384xf32> -> vector<16x384xf32>
    %c0_9 = arith.constant 0 : index
    %c1024 = arith.constant 1024 : index
    %16 = vector.load %arg4[%c0_9, %c1024] : memref<1x1796xf32, #tpu.memory_space<vmem>>, vector<1x384xf32>
    %17 = vector.broadcast %16 : vector<1x384xf32> to vector<16x384xf32>
    %18 = arith.addf %15, %17 : vector<16x384xf32>
    %cst_10 = arith.constant 0.00999999977 : f32
    %19 = vector.broadcast %cst_10 : f32 to vector<16x384xf32>
    %20 = arith.mulf %19, %18 : vector<16x384xf32>
    %21 = arith.maximumf %18, %20 : vector<16x384xf32>
    %c0_11 = arith.constant 0 : index
    %c384 = arith.constant 384 : index
    %22 = vector.load %arg2[%c0_11, %c384] : memref<512x768xbf16, #tpu.memory_space<vmem>>, vector<512x384xbf16>
    %cst_12 = arith.constant dense<0.000000e+00> : vector<16x384xf32>
    %23 = tpu.matmul %13, %22, %cst_12 {dimension_numbers = #tpu.dot_dimension_numbers<[1], [0], [0], [1], [0, 0, 1, 1], [], []>} : vector<16x512xbf16>, vector<512x384xbf16>, vector<16x384xf32> -> vector<16x384xf32>
    %c0_13 = arith.constant 0 : index
    %c1408 = arith.constant 1408 : index
    %24 = vector.load %arg4[%c0_13, %c1408] : memref<1x1796xf32, #tpu.memory_space<vmem>>, vector<1x384xf32>
    %25 = vector.broadcast %24 : vector<1x384xf32> to vector<16x384xf32>
    %26 = arith.addf %23, %25 : vector<16x384xf32>
    %cst_14 = arith.constant 0.00999999977 : f32
    %27 = vector.broadcast %cst_14 : f32 to vector<16x384xf32>
    %28 = arith.mulf %27, %26 : vector<16x384xf32>
    %29 = arith.maximumf %26, %28 : vector<16x384xf32>
    %30 = arith.truncf %21 : vector<16x384xf32> to vector<16x384xbf16>
    %c0_15 = arith.constant 0 : index
    %c0_16 = arith.constant 0 : index
    %31 = vector.load %arg3[%c0_15, %c0_16] : memref<768x4xbf16, #tpu.memory_space<vmem>>, vector<384x4xbf16>
    %cst_17 = arith.constant dense<0.000000e+00> : vector<16x4xf32>
    %32 = tpu.matmul %30, %31, %cst_17 {dimension_numbers = #tpu.dot_dimension_numbers<[1], [0], [0], [1], [0, 0, 1, 1], [], []>} : vector<16x384xbf16>, vector<384x4xbf16>, vector<16x4xf32> -> vector<16x4xf32>
    %33 = arith.truncf %29 : vector<16x384xf32> to vector<16x384xbf16>
    %c384_18 = arith.constant 384 : index
    %c0_19 = arith.constant 0 : index
    %34 = vector.load %arg3[%c384_18, %c0_19] : memref<768x4xbf16, #tpu.memory_space<vmem>>, vector<384x4xbf16>
    %cst_20 = arith.constant dense<0.000000e+00> : vector<16x4xf32>
    %35 = tpu.matmul %33, %34, %cst_20 {dimension_numbers = #tpu.dot_dimension_numbers<[1], [0], [0], [1], [0, 0, 1, 1], [], []>} : vector<16x384xbf16>, vector<384x4xbf16>, vector<16x4xf32> -> vector<16x4xf32>
    %36 = arith.addf %32, %35 : vector<16x4xf32>
    %c0_21 = arith.constant 0 : index
    %c1792 = arith.constant 1792 : index
    %37 = vector.load %arg4[%c0_21, %c1792] : memref<1x1796xf32, #tpu.memory_space<vmem>>, vector<1x4xf32>
    %38 = vector.broadcast %37 : vector<1x4xf32> to vector<16x4xf32>
    %39 = arith.addf %36, %38 : vector<16x4xf32>
    %c0_22 = arith.constant 0 : index
    %c0_23 = arith.constant 0 : index
    %40 = vector.load %arg5[%c0_22, %c0_23] : memref<16x4xf32, #tpu.memory_space<vmem>>, vector<16x4xf32>
    tpu.vector_store %arg5[%c0_22, %c0_23], %39 {strides = array<i32>} : memref<16x4xf32, #tpu.memory_space<vmem>>, vector<16x4xf32>,
    return
  }
}

</mosaic_0001>

<llo_original>
// kernel: tpu_custom_call.1
$region0: #{tpu_custom_call.1}
  #allocation0 [shape = 'u32[]', space=smem, size = 0x4, offset = 0x4, fixed_abs, tag = 'smem constant byte address 0x4 - core index']
  #allocation1 [shape = 'u32[144,128]{1,0:T(1,128)}', space=vmem, size = 0x12000, scoped, tag = 'internal scratch']
  %s0 = inlined_call_operand.vmem [shape: f32[16,27], index: 0, kind: input, shape index: {}]
  %s1 = inlined_call_operand.vmem [shape: bf16[27,1024], index: 1, kind: input, shape index: {}]
  %s2 = inlined_call_operand.hbm [shape: bf16[512,768], index: 2, kind: input, shape index: {}]
  %s3 = inlined_call_operand.vmem [shape: bf16[768,4], index: 3, kind: input, shape index: {}]
  %s4 = inlined_call_operand.vmem [shape: f32[1,1796], index: 4, kind: input, shape index: {}]
  %s5 = inlined_call_operand.vmem [shape: f32[16,4], index: 5, kind: output, shape index: {}]
  %s6 = sld [smem:[#allocation0]]
  $region34: #{tpu_custom_call.1} parent=0
    _
  %s8 = ssub.s32 1, %s6
  %s9 = scalar_select 0, %s8, %s6
  $region1: #{tpu_custom_call.1} parent=0
    #allocation2 [shape = 'u8[786432]{0}', space=vmem, size = 0xc0000, scoped, tag = 'input window, operand 2, single buffered']
    #allocation3 [shape = 's32[1]{0}', space=sflag, size = 0x4, scoped, tag = 'scoped memory for tpu_custom_call.1']
    %10 = vsyncpa [#allocation3], 0
    // Predicated region
    $region2: #{tpu_custom_call.1} parent=1 // pred_check
      _
    $region3: #{tpu_custom_call.1} parent=1 // pred_check_branch
      %12 = sbr.rel (0) target = $region5
    $region4: #{tpu_custom_call.1} parent=1 // pred_region
      _
    $region5: #{tpu_custom_call.1} parent=1 // pred_fallthru
      _
    // Predicated region
    $region6: #{tpu_custom_call.1} parent=1 // pred_check
      _
    $region7: #{tpu_custom_call.1} parent=1 // pred_check_branch
      %14 = sbr.rel (0) target = $region9
    $region8: #{tpu_custom_call.1} parent=1 // pred_region
      _
    $region9: #{tpu_custom_call.1} parent=1 // pred_fallthru
      _
    // Predicated region
    $region10: #{tpu_custom_call.1} parent=1 // pred_check
      _
    $region11: #{tpu_custom_call.1} parent=1 // pred_check_branch
      %16 = sbr.rel (0) target = $region13
    $region12: #{tpu_custom_call.1} parent=1 // pred_region
      %s18 = ssub.s32 24576, 24576
      %19 = vsyncadd [#allocation3], %s18
      %s20 = sshll.u32 [#allocation2], 4
      %s21 = int_to_ptr.vmem [resolvable:$true] %s20
      %26 = dma.hbm_to_vmem [thread:$0]  %s2, 24576, %s21, [#allocation3], 384, 384, 24
    $region13: #{tpu_custom_call.1} parent=1 // pred_fallthru
      _
    // Predicated region
    $region14: #{tpu_custom_call.1} parent=1 // pred_check
      _
    $region15: #{tpu_custom_call.1} parent=1 // pred_check_branch
      %28 = sbr.rel (0) target = $region17
    $region16: #{tpu_custom_call.1} parent=1 // pred_region
      _
    $region17: #{tpu_custom_call.1} parent=1 // pred_fallthru
      _
    // Predicated region
    $region18: #{tpu_custom_call.1} parent=1 // pred_check
      _
    $region19: #{tpu_custom_call.1} parent=1 // pred_check_branch
      %30 = sbr.rel (0) target = $region21
    $region20: #{tpu_custom_call.1} parent=1 // pred_region
      _
    $region21: #{tpu_custom_call.1} parent=1 // pred_fallthru
      _
    // Predicated region
    $region22: #{tpu_custom_call.1} parent=1 // pred_check
      _
    $region23: #{tpu_custom_call.1} parent=1 // pred_check_branch
      %32 = sbr.rel (0) target = $region25
    $region24: #{tpu_custom_call.1} parent=1 // pred_region
      %33 = dma.done [#allocation3], 24576
    $region25: #{tpu_custom_call.1} parent=1 // pred_fallthru
      _
    %v35 = vld [vmem:[%s0] sm:$0xff]
    %v36 = vld [vmem:[%s0 + $0x8] sm:$0xff]
    %v37 = vpack.c.bf16 %v36, %v35
    %v38 = vld [vmem:[%s1] sm:$0xff]
    %v39 = vld [vmem:[%s1 + $0x8] sm:$0xff]
    %v40 = vld [vmem:[%s1 + $0x10] sm:$0xff]
    %v41 = vld [vmem:[%s1 + $0x18] sm:$0xff]
    %v42 = vld [vmem:[%s1 + $0x20] sm:$0xff]
    %v43 = vld [vmem:[%s1 + $0x28] sm:$0xff]
    %v44 = vld [vmem:[%s1 + $0x30] sm:$0xff]
    %v45 = vld [vmem:[%s1 + $0x38] sm:$0xff]
    %v46 = vld [vmem:[%s1 + $0x40] sm:$0xff]
    %v47 = vld [vmem:[%s1 + $0x48] sm:$0xff]
    %v48 = vld [vmem:[%s1 + $0x50] sm:$0xff]
    %v49 = vld [vmem:[%s1 + $0x58] sm:$0xff]
    %v50 = vld [vmem:[%s1 + $0x60] sm:$0x33]
    %v51 = vld [vmem:[%s1 + $0x68] sm:$0x33]
    %v52 = vld [vmem:[%s1 + $0x70] sm:$0x33]
    %v53 = vld [vmem:[%s1 + $0x78] sm:$0x33]
    %v54 = vld [vmem:[%s4] sm:$0xff]
    %v56 = vlaneseq
    %v57 = vshrl.u32 %v56, 7
    %v58 = vsub.s32 0, %v57
    %v59 = vrot.slane %v54, %v58
    %v60 = vlaneseq
    %v61 = vshrl.u32 %v60, 7
    %v62 = vsub.s32 1, %v61
    %v63 = vrot.slane %v54, %v62
    %v64 = vlaneseq
    %v65 = vshrl.u32 %v64, 7
    %v66 = vsub.s32 2, %v65
    %v67 = vrot.slane %v54, %v66
    %v68 = vlaneseq
    %v69 = vshrl.u32 %v68, 7
    %v70 = vsub.s32 3, %v69
    %v71 = vrot.slane %v54, %v70
    %v72 = vlaneseq
    %v73 = vshrl.u32 %v72, 7
    %v74 = vsub.s32 4, %v73
    %v75 = vrot.slane %v54, %v74
    %v76 = vlaneseq
    %v77 = vshrl.u32 %v76, 7
    %v78 = vsub.s32 5, %v77
    %v79 = vrot.slane %v54, %v78
    %v80 = vlaneseq
    %v81 = vshrl.u32 %v80, 7
    %v82 = vsub.s32 6, %v81
    %v83 = vrot.slane %v54, %v82
    %v84 = vlaneseq
    %v85 = vshrl.u32 %v84, 7
    %v86 = vsub.s32 7, %v85
    %v87 = vrot.slane %v54, %v86
    %v112 = vunpack.c.l.b16 %v38
    %v113 = vunpack.c.h.b16 %v38
    %v114 = vunpack.c.l.b16 %v39
    %v115 = vunpack.c.h.b16 %v39
    %v116 = vunpack.c.l.b16 %v40
    %v117 = vunpack.c.h.b16 %v40
    %v118 = vunpack.c.l.b16 %v41
    %v119 = vunpack.c.h.b16 %v41
    %v120 = vunpack.c.l.b16 %v42
    %v121 = vunpack.c.h.b16 %v42
    %v122 = vunpack.c.l.b16 %v43
    %v123 = vunpack.c.h.b16 %v43
    %v124 = vunpack.c.l.b16 %v44
    %v125 = vunpack.c.h.b16 %v44
    %v126 = vunpack.c.l.b16 %v45
    %v127 = vunpack.c.h.b16 %v45
    %v128 = vunpack.c.l.b16 %v46
    %v129 = vunpack.c.h.b16 %v46
    %v130 = vunpack.c.l.b16 %v47
    %v131 = vunpack.c.h.b16 %v47
    %v132 = vunpack.c.l.b16 %v48
    %v133 = vunpack.c.h.b16 %v48
    %v134 = vunpack.c.l.b16 %v49
    %v135 = vunpack.c.h.b16 %v49
    %v136 = vunpack.c.l.b16 %v50
    %v137 = vunpack.c.h.b16 %v50
    %v138 = vunpack.c.l.b16 %v51
    %v139 = vunpack.c.h.b16 %v51
    %v140 = vunpack.c.l.b16 %v52
    %v141 = vunpack.c.h.b16 %v52
    %v142 = vunpack.c.l.b16 %v53
    %v143 = vunpack.c.h.b16 %v53
    %v144 = vpack.c.b16 %v120, %v112
    %v145 = vpack.c.b16 %v121, %v113
    %v146 = vpack.c.b16 %v122, %v114
    %v147 = vpack.c.b16 %v123, %v115
    %v148 = vpack.c.b16 %v124, %v116
    %v149 = vpack.c.b16 %v125, %v117
    %v150 = vpack.c.b16 %v126, %v118
    %v151 = vpack.c.b16 %v127, %v119
    %v152 = vpack.c.b16 %v136, %v128
    %v153 = vpack.c.b16 %v137, %v129
    %v154 = vpack.c.b16 %v138, %v130
    %v155 = vpack.c.b16 %v139, %v131
    %v156 = vpack.c.b16 %v140, %v132
    %v157 = vpack.c.b16 %v141, %v133
    %v158 = vpack.c.b16 %v142, %v134
    %v159 = vpack.c.b16 %v143, %v135
    %vm168 = vcmask 220160
    %v170 = vsel %vm168, %v37, 0
    %vm172 = vcmask 1044480
    %vm173 = vcmask 1045504
    %v174 = vsel %vm172, 4294967295, 65535
    %v175 = vsel %vm173, %v174, 0
    %v177 = vand.u32 %v152, %v175
    %v180 = vand.u32 %v153, %v175
    %v183 = vand.u32 %v154, %v175
    %v186 = vand.u32 %v155, %v175
    %v189 = vand.u32 %v156, %v175
    %v192 = vand.u32 %v157, %v175
    %v195 = vand.u32 %v158, %v175
    %v198 = vand.u32 %v159, %v175
    %200 = vmatprep.subr.bf16.mxu0 %v145
    %201 = vmatpush1.bf16.msra.mxu0 %v144
    %202 = vmatprep.subr.bf16.mxu0 %v180
    %203 = vmatpush1.bf16.msra.mxu0 %v177
    %204 = vmatprep.subr.bf16.mxu0 0
    %205 = vmatpush1.bf16.msra.mxu0 0
    %206 = vmatprep.subr.bf16.mxu0 0
    %207 = vmatpush1.bf16.msra.mxu0 0
    %208 = vmatprep.subr.bf16.mxu0 0
    %209 = vmatpush1.bf16.msra.mxu0 0
    %210 = vmatprep.subr.bf16.mxu0 0
    %211 = vmatpush1.bf16.msra.mxu0 0
    %212 = vmatprep.subr.bf16.mxu0 0
    %213 = vmatpush1.bf16.msra.mxu0 0
    %214 = vmatprep.subr.bf16.mxu0 0
    %215 = vmatpush1.bf16.msra.mxu0 0
    %216 = vmatprep.subr.bf16.mxu0 0
    %217 = vmatpush1.bf16.msra.mxu0 0
    %218 = vmatprep.subr.bf16.mxu0 0
    %219 = vmatpush1.bf16.msra.mxu0 0
    %220 = vmatprep.subr.bf16.mxu0 0
    %221 = vmatpush1.bf16.msra.mxu0 0
    %222 = vmatprep.subr.bf16.mxu0 0
    %223 = vmatpush1.bf16.msra.mxu0 0
    %224 = vmatprep.subr.bf16.mxu0 0
    %225 = vmatpush1.bf16.msra.mxu0 0
    %226 = vmatprep.subr.bf16.mxu0 0
    %227 = vmatpush1.bf16.msra.mxu0 0
    %228 = vmatprep.subr.bf16.mxu0 0
    %229 = vmatpush1.bf16.msra.mxu0 0
    %230 = vmatprep.subr.bf16.mxu0 0
    %231 = vmatpush1.bf16.msra.mxu0 0
    %232 = vmatprep.mubr.bf16.mxu0 0
    %233 = vmatmul.mubr.bf16.gmra.mrb[0].mxu0 %v170
    %v234 = vpop.f32.mrb[0].mxu0
    %v235 = vadd.f32 %v59, %v234
    %v236 = vpop.f32.mrb[0].mxu0
    %v237 = vadd.f32 %v63, %v236
    %v238 = vpop.f32.mrb[0].mxu0
    %v239 = vadd.f32 %v59, %v238
    %v240 = vpop.f32.mrb[0].mxu0
    %v241 = vadd.f32 %v63, %v240
    %242 = vdwg.mxu0
    %243 = vmatprep.subr.bf16.mxu0 %v147
    %244 = vmatpush1.bf16.msra.mxu0 %v146
    %245 = vmatprep.subr.bf16.mxu0 %v186
    %246 = vmatpush1.bf16.msra.mxu0 %v183
    %247 = vmatprep.subr.bf16.mxu0 0
    %248 = vmatpush1.bf16.msra.mxu0 0
    %249 = vmatprep.subr.bf16.mxu0 0
    %250 = vmatpush1.bf16.msra.mxu0 0
    %251 = vmatprep.subr.bf16.mxu0 0
    %252 = vmatpush1.bf16.msra.mxu0 0
    %253 = vmatprep.subr.bf16.mxu0 0
    %254 = vmatpush1.bf16.msra.mxu0 0
    %255 = vmatprep.subr.bf16.mxu0 0
    %256 = vmatpush1.bf16.msra.mxu0 0
    %257 = vmatprep.subr.bf16.mxu0 0
    %258 = vmatpush1.bf16.msra.mxu0 0
    %259 = vmatprep.subr.bf16.mxu0 0
    %260 = vmatpush1.bf16.msra.mxu0 0
    %261 = vmatprep.subr.bf16.mxu0 0
    %262 = vmatpush1.bf16.msra.mxu0 0
    %263 = vmatprep.subr.bf16.mxu0 0
    %264 = vmatpush1.bf16.msra.mxu0 0
    %265 = vmatprep.subr.bf16.mxu0 0
    %266 = vmatpush1.bf16.msra.mxu0 0
    %267 = vmatprep.subr.bf16.mxu0 0
    %268 = vmatpush1.bf16.msra.mxu0 0
    %269 = vmatprep.subr.bf16.mxu0 0
    %270 = vmatpush1.bf16.msra.mxu0 0
    %271 = vmatprep.subr.bf16.mxu0 0
    %272 = vmatpush1.bf16.msra.mxu0 0
    %273 = vmatprep.subr.bf16.mxu0 0
    %274 = vmatpush1.bf16.msra.mxu0 0
    %275 = vmatprep.mubr.bf16.mxu0 0
    %276 = vmatmul.mubr.bf16.gmra.mrb[0].mxu0 %v170
    %v277 = vpop.f32.mrb[0].mxu0
    %v278 = vadd.f32 %v67, %v277
    %v279 = vpop.f32.mrb[0].mxu0
    %v280 = vadd.f32 %v71, %v279
    %v281 = vpop.f32.mrb[0].mxu0
    %v282 = vadd.f32 %v67, %v281
    %v283 = vpop.f32.mrb[0].mxu0
    %v284 = vadd.f32 %v71, %v283
    %285 = vdwg.mxu0
    %286 = vmatprep.subr.bf16.mxu0 %v149
    %287 = vmatpush1.bf16.msra.mxu0 %v148
    %288 = vmatprep.subr.bf16.mxu0 %v192
    %289 = vmatpush1.bf16.msra.mxu0 %v189
    %290 = vmatprep.subr.bf16.mxu0 0
    %291 = vmatpush1.bf16.msra.mxu0 0
    %292 = vmatprep.subr.bf16.mxu0 0
    %293 = vmatpush1.bf16.msra.mxu0 0
    %294 = vmatprep.subr.bf16.mxu0 0
    %295 = vmatpush1.bf16.msra.mxu0 0
    %296 = vmatprep.subr.bf16.mxu0 0
    %297 = vmatpush1.bf16.msra.mxu0 0
    %298 = vmatprep.subr.bf16.mxu0 0
    %299 = vmatpush1.bf16.msra.mxu0 0
    %300 = vmatprep.subr.bf16.mxu0 0
    %301 = vmatpush1.bf16.msra.mxu0 0
    %302 = vmatprep.subr.bf16.mxu0 0
    %303 = vmatpush1.bf16.msra.mxu0 0
    %304 = vmatprep.subr.bf16.mxu0 0
    %305 = vmatpush1.bf16.msra.mxu0 0
    %306 = vmatprep.subr.bf16.mxu0 0
    %307 = vmatpush1.bf16.msra.mxu0 0
    %308 = vmatprep.subr.bf16.mxu0 0
    %309 = vmatpush1.bf16.msra.mxu0 0
    %310 = vmatprep.subr.bf16.mxu0 0
    %311 = vmatpush1.bf16.msra.mxu0 0
    %312 = vmatprep.subr.bf16.mxu0 0
    %313 = vmatpush1.bf16.msra.mxu0 0
    %314 = vmatprep.subr.bf16.mxu0 0
    %315 = vmatpush1.bf16.msra.mxu0 0
    %316 = vmatprep.subr.bf16.mxu0 0
    %317 = vmatpush1.bf16.msra.mxu0 0
    %318 = vmatprep.mubr.bf16.mxu0 0
    %319 = vmatmul.mubr.bf16.gmra.mrb[0].mxu0 %v170
    %v320 = vpop.f32.mrb[0].mxu0
    %v321 = vadd.f32 %v75, %v320
    %v322 = vpop.f32.mrb[0].mxu0
    %v323 = vadd.f32 %v79, %v322
    %v324 = vpop.f32.mrb[0].mxu0
    %v325 = vadd.f32 %v75, %v324
    %v326 = vpop.f32.mrb[0].mxu0
    %v327 = vadd.f32 %v79, %v326
    %328 = vdwg.mxu0
    %329 = vmatprep.subr.bf16.mxu0 %v151
    %330 = vmatpush1.bf16.msra.mxu0 %v150
    %331 = vmatprep.subr.bf16.mxu0 %v198
    %332 = vmatpush1.bf16.msra.mxu0 %v195
    %333 = vmatprep.subr.bf16.mxu0 0
    %334 = vmatpush1.bf16.msra.mxu0 0
    %335 = vmatprep.subr.bf16.mxu0 0
    %336 = vmatpush1.bf16.msra.mxu0 0
    %337 = vmatprep.subr.bf16.mxu0 0
    %338 = vmatpush1.bf16.msra.mxu0 0
    %339 = vmatprep.subr.bf16.mxu0 0
    %340 = vmatpush1.bf16.msra.mxu0 0
    %341 = vmatprep.subr.bf16.mxu0 0
    %342 = vmatpush1.bf16.msra.mxu0 0
    %343 = vmatprep.subr.bf16.mxu0 0
    %344 = vmatpush1.bf16.msra.mxu0 0
    %345 = vmatprep.subr.bf16.mxu0 0
    %346 = vmatpush1.bf16.msra.mxu0 0
    %347 = vmatprep.subr.bf16.mxu0 0
    %348 = vmatpush1.bf16.msra.mxu0 0
    %349 = vmatprep.subr.bf16.mxu0 0
    %350 = vmatpush1.bf16.msra.mxu0 0
    %351 = vmatprep.subr.bf16.mxu0 0
    %352 = vmatpush1.bf16.msra.mxu0 0
    %353 = vmatprep.subr.bf16.mxu0 0
    %354 = vmatpush1.bf16.msra.mxu0 0
    %355 = vmatprep.subr.bf16.mxu0 0
    %356 = vmatpush1.bf16.msra.mxu0 0
    %357 = vmatprep.subr.bf16.mxu0 0
    %358 = vmatpush1.bf16.msra.mxu0 0
    %359 = vmatprep.subr.bf16.mxu0 0
    %360 = vmatpush1.bf16.msra.mxu0 0
    %361 = vmatprep.mubr.bf16.mxu0 0
    %362 = vmatmul.mubr.bf16.gmra.mrb[0].mxu0 %v170
    %v363 = vpop.f32.mrb[0].mxu0
    %v364 = vadd.f32 %v83, %v363
    %v365 = vpop.f32.mrb[0].mxu0
    %v366 = vadd.f32 %v87, %v365
    %v367 = vpop.f32.mrb[0].mxu0
    %v368 = vadd.f32 %v83, %v367
    %v369 = vpop.f32.mrb[0].mxu0
    %v370 = vadd.f32 %v87, %v369
    %371 = vdwg.mxu0
    %v372 = vmul.f32 %v235, 0.01
    %v373 = vmul.f32 %v237, 0.01
    %v374 = vmul.f32 %v278, 0.01
    %v375 = vmul.f32 %v280, 0.01
    %v376 = vmul.f32 %v321, 0.01
    %v377 = vmul.f32 %v323, 0.01
    %v378 = vmul.f32 %v364, 0.01
    %v379 = vmul.f32 %v366, 0.01
    %v380 = vmul.f32 %v239, 0.01
    %v381 = vmul.f32 %v241, 0.01
    %v382 = vmul.f32 %v282, 0.01
    %v383 = vmul.f32 %v284, 0.01
    %v384 = vmul.f32 %v325, 0.01
    %v385 = vmul.f32 %v327, 0.01
    %v386 = vmul.f32 %v368, 0.01
    %v387 = vmul.f32 %v370, 0.01
    %v388 = vmax.f32 %v235, %v372
    %v389 = vmax.f32 %v237, %v373
    %v390 = vmax.f32 %v278, %v374
    %v391 = vmax.f32 %v280, %v375
    %v392 = vmax.f32 %v321, %v376
    %v393 = vmax.f32 %v323, %v377
    %v394 = vmax.f32 %v364, %v378
    %v395 = vmax.f32 %v366, %v379
    %v396 = vmax.f32 %v239, %v380
    %v397 = vmax.f32 %v241, %v381
    %v398 = vmax.f32 %v282, %v382
    %v399 = vmax.f32 %v284, %v383
    %v400 = vmax.f32 %v325, %v384
    %v401 = vmax.f32 %v327, %v385
    %v402 = vmax.f32 %v368, %v386
    %v403 = vmax.f32 %v370, %v387
    %v404 = vpack.c.bf16 %v396, %v388
    %v405 = vpack.c.bf16 %v397, %v389
    %v406 = vpack.c.bf16 %v398, %v390
    %v407 = vpack.c.bf16 %v399, %v391
    %v408 = vpack.c.bf16 %v400, %v392
    %v409 = vpack.c.bf16 %v401, %v393
    %v410 = vpack.c.bf16 %v402, %v394
    %v411 = vpack.c.bf16 %v403, %v395
    %v412 = vld [vmem:[#allocation2] sm:$0xff]
    %v413 = vld [vmem:[#allocation2 + $0x8] sm:$0xf]
    %v414 = vld [vmem:[#allocation2 + $0x18] sm:$0xff]
    %v415 = vld [vmem:[#allocation2 + $0x20] sm:$0xf]
    %v416 = vld [vmem:[#allocation2 + $0x30] sm:$0xff]
    %v417 = vld [vmem:[#allocation2 + $0x38] sm:$0xf]
    %v418 = vld [vmem:[#allocation2 + $0x48] sm:$0xff]
    %v419 = vld [vmem:[#allocation2 + $0x50] sm:$0xf]
    %v420 = vld [vmem:[#allocation2 + $0x60] sm:$0xff]
    %v421 = vld [vmem:[#allocation2 + $0x68] sm:$0xf]
    %v422 = vld [vmem:[#allocation2 + $0x78] sm:$0xff]
    %v423 = vld [vmem:[#allocation2 + $0x80] sm:$0xf]
    %v424 = vld [vmem:[#allocation2 + $0x90] sm:$0xff]
    %v425 = vld [vmem:[#allocation2 + $0x98] sm:$0xf]
    %v426 = vld [vmem:[#allocation2 + $0xa8] sm:$0xff]
    %v427 = vld [vmem:[#allocation2 + $0xb0] sm:$0xf]
    %v428 = vld [vmem:[#allocation2 + $0xc0] sm:$0xff]
    %v429 = vld [vmem:[#allocation2 + $0xc8] sm:$0xf]
    %v430 = vld [vmem:[#allocation2 + $0xd8] sm:$0xff]
    %v431 = vld [vmem:[#allocation2 + $0xe0] sm:$0xf]
    %v432 = vld [vmem:[#allocation2 + $0xf0] sm:$0xff]
    %v433 = vld [vmem:[#allocation2 + $0xf8] sm:$0xf]
    %v434 = vld [vmem:[#allocation2 + $0x108] sm:$0xff]
    %v435 = vld [vmem:[#allocation2 + $0x110] sm:$0xf]
    %v436 = vld [vmem:[#allocation2 + $0x120] sm:$0xff]
    %v437 = vld [vmem:[#allocation2 + $0x128] sm:$0xf]
    %v438 = vld [vmem:[#allocation2 + $0x138] sm:$0xff]
    %v439 = vld [vmem:[#allocation2 + $0x140] sm:$0xf]
    %v440 = vld [vmem:[#allocation2 + $0x150] sm:$0xff]
    %v441 = vld [vmem:[#allocation2 + $0x158] sm:$0xf]
    %v442 = vld [vmem:[#allocation2 + $0x168] sm:$0xff]
    %v443 = vld [vmem:[#allocation2 + $0x170] sm:$0xf]
    %v444 = vld [vmem:[#allocation2 + $0x180] sm:$0xff]
    %v445 = vld [vmem:[#allocation2 + $0x188] sm:$0xf]
    %v446 = vld [vmem:[#allocation2 + $0x198] sm:$0xff]
    %v447 = vld [vmem:[#allocation2 + $0x1a0] sm:$0xf]
    %v448 = vld [vmem:[#allocation2 + $0x1b0] sm:$0xff]
    %v449 = vld [vmem:[#allocation2 + $0x1b8] sm:$0xf]
    %v450 = vld [vmem:[#allocation2 + $0x1c8] sm:$0xff]
    %v451 = vld [vmem:[#allocation2 + $0x1d0] sm:$0xf]
    %v452 = vld [vmem:[#allocation2 + $0x1e0] sm:$0xff]
    %v453 = vld [vmem:[#allocation2 + $0x1e8] sm:$0xf]
    %v454 = vld [vmem:[#allocation2 + $0x1f8] sm:$0xff]
    %v455 = vld [vmem:[#allocation2 + $0x200] sm:$0xf]
    %v456 = vld [vmem:[#allocation2 + $0x210] sm:$0xff]
    %v457 = vld [vmem:[#allocation2 + $0x218] sm:$0xf]
    %v458 = vld [vmem:[#allocation2 + $0x228] sm:$0xff]
    %v459 = vld [vmem:[#allocation2 + $0x230] sm:$0xf]
    %v460 = vld [vmem:[#allocation2 + $0x240] sm:$0xff]
    %v461 = vld [vmem:[#allocation2 + $0x248] sm:$0xf]
    %v462 = vld [vmem:[#allocation2 + $0x258] sm:$0xff]
    %v463 = vld [vmem:[#allocation2 + $0x260] sm:$0xf]
    %v464 = vld [vmem:[#allocation2 + $0x270] sm:$0xff]
    %v465 = vld [vmem:[#allocation2 + $0x278] sm:$0xf]
    %v466 = vld [vmem:[#allocation2 + $0x288] sm:$0xff]
    %v467 = vld [vmem:[#allocation2 + $0x290] sm:$0xf]
    %v468 = vld [vmem:[#allocation2 + $0x2a0] sm:$0xff]
    %v469 = vld [vmem:[#allocation2 + $0x2a8] sm:$0xf]
    %v470 = vld [vmem:[#allocation2 + $0x2b8] sm:$0xff]
    %v471 = vld [vmem:[#allocation2 + $0x2c0] sm:$0xf]
    %v472 = vld [vmem:[#allocation2 + $0x2d0] sm:$0xff]
    %v473 = vld [vmem:[#allocation2 + $0x2d8] sm:$0xf]
    %v474 = vld [vmem:[#allocation2 + $0x2e8] sm:$0xff]
    %v475 = vld [vmem:[#allocation2 + $0x2f0] sm:$0xf]
    %v476 = vld [vmem:[#allocation2 + $0x300] sm:$0xff]
    %v477 = vld [vmem:[#allocation2 + $0x308] sm:$0xf]
    %v478 = vld [vmem:[#allocation2 + $0x318] sm:$0xff]
    %v479 = vld [vmem:[#allocation2 + $0x320] sm:$0xf]
    %v480 = vld [vmem:[#allocation2 + $0x330] sm:$0xff]
    %v481 = vld [vmem:[#allocation2 + $0x338] sm:$0xf]
    %v482 = vld [vmem:[#allocation2 + $0x348] sm:$0xff]
    %v483 = vld [vmem:[#allocation2 + $0x350] sm:$0xf]
    %v484 = vld [vmem:[#allocation2 + $0x360] sm:$0xff]
    %v485 = vld [vmem:[#allocation2 + $0x368] sm:$0xf]
    %v486 = vld [vmem:[#allocation2 + $0x378] sm:$0xff]
    %v487 = vld [vmem:[#allocation2 + $0x380] sm:$0xf]
    %v488 = vld [vmem:[#allocation2 + $0x390] sm:$0xff]
    %v489 = vld [vmem:[#allocation2 + $0x398] sm:$0xf]
    %v490 = vld [vmem:[#allocation2 + $0x3a8] sm:$0xff]
    %v491 = vld [vmem:[#allocation2 + $0x3b0] sm:$0xf]
    %v492 = vld [vmem:[#allocation2 + $0x3c0] sm:$0xff]
    %v493 = vld [vmem:[#allocation2 + $0x3c8] sm:$0xf]
    %v494 = vld [vmem:[#allocation2 + $0x3d8] sm:$0xff]
    %v495 = vld [vmem:[#allocation2 + $0x3e0] sm:$0xf]
    %v496 = vld [vmem:[#allocation2 + $0x3f0] sm:$0xff]
    %v497 = vld [vmem:[#allocation2 + $0x3f8] sm:$0xf]
    %v498 = vld [vmem:[#allocation2 + $0x408] sm:$0xff]
    %v499 = vld [vmem:[#allocation2 + $0x410] sm:$0xf]
    %v500 = vld [vmem:[#allocation2 + $0x420] sm:$0xff]
    %v501 = vld [vmem:[#allocation2 + $0x428] sm:$0xf]
    %v502 = vld [vmem:[#allocation2 + $0x438] sm:$0xff]
    %v503 = vld [vmem:[#allocation2 + $0x440] sm:$0xf]
    %v504 = vld [vmem:[#allocation2 + $0x450] sm:$0xff]
    %v505 = vld [vmem:[#allocation2 + $0x458] sm:$0xf]
    %v506 = vld [vmem:[#allocation2 + $0x468] sm:$0xff]
    %v507 = vld [vmem:[#allocation2 + $0x470] sm:$0xf]
    %v508 = vld [vmem:[#allocation2 + $0x480] sm:$0xff]
    %v509 = vld [vmem:[#allocation2 + $0x488] sm:$0xf]
    %v510 = vld [vmem:[#allocation2 + $0x498] sm:$0xff]
    %v511 = vld [vmem:[#allocation2 + $0x4a0] sm:$0xf]
    %v512 = vld [vmem:[#allocation2 + $0x4b0] sm:$0xff]
    %v513 = vld [vmem:[#allocation2 + $0x4b8] sm:$0xf]
    %v514 = vld [vmem:[#allocation2 + $0x4c8] sm:$0xff]
    %v515 = vld [vmem:[#allocation2 + $0x4d0] sm:$0xf]
    %v516 = vld [vmem:[#allocation2 + $0x4e0] sm:$0xff]
    %v517 = vld [vmem:[#allocation2 + $0x4e8] sm:$0xf]
    %v518 = vld [vmem:[#allocation2 + $0x4f8] sm:$0xff]
    %v519 = vld [vmem:[#allocation2 + $0x500] sm:$0xf]
    %v520 = vld [vmem:[#allocation2 + $0x510] sm:$0xff]
    %v521 = vld [vmem:[#allocation2 + $0x518] sm:$0xf]
    %v522 = vld [vmem:[#allocation2 + $0x528] sm:$0xff]
    %v523 = vld [vmem:[#allocation2 + $0x530] sm:$0xf]
    %v524 = vld [vmem:[#allocation2 + $0x540] sm:$0xff]
    %v525 = vld [vmem:[#allocation2 + $0x548] sm:$0xf]
    %v526 = vld [vmem:[#allocation2 + $0x558] sm:$0xff]
    %v527 = vld [vmem:[#allocation2 + $0x560] sm:$0xf]
    %v528 = vld [vmem:[#allocation2 + $0x570] sm:$0xff]
    %v529 = vld [vmem:[#allocation2 + $0x578] sm:$0xf]
    %v530 = vld [vmem:[#allocation2 + $0x588] sm:$0xff]
    %v531 = vld [vmem:[#allocation2 + $0x590] sm:$0xf]
    %v532 = vld [vmem:[#allocation2 + $0x5a0] sm:$0xff]
    %v533 = vld [vmem:[#allocation2 + $0x5a8] sm:$0xf]
    %v534 = vld [vmem:[#allocation2 + $0x5b8] sm:$0xff]
    %v535 = vld [vmem:[#allocation2 + $0x5c0] sm:$0xf]
    %v536 = vld [vmem:[#allocation2 + $0x5d0] sm:$0xff]
    %v537 = vld [vmem:[#allocation2 + $0x5d8] sm:$0xf]
    %v538 = vld [vmem:[#allocation2 + $0x5e8] sm:$0xff]
    %v539 = vld [vmem:[#allocation2 + $0x5f0] sm:$0xf]
    %v540 = vld [vmem:[%s4 + $0x8] sm:$0x7]
    %v542 = vlaneseq
    %v543 = vshrl.u32 %v542, 7
    %v544 = vsub.s32 0, %v543
    %v545 = vrot.slane %v540, %v544
    %v546 = vlaneseq
    %v547 = vshrl.u32 %v546, 7
    %v548 = vsub.s32 1, %v547
    %v549 = vrot.slane %v540, %v548
    %v550 = vlaneseq
    %v551 = vshrl.u32 %v550, 7
    %v552 = vsub.s32 2, %v551
    %v553 = vrot.slane %v540, %v552
    %v685 = vunpack.c.l.b16 %v412
    %v686 = vunpack.c.h.b16 %v412
    %v687 = vunpack.c.l.b16 %v413
    %v688 = vunpack.c.l.b16 %v414
    %v689 = vunpack.c.h.b16 %v414
    %v690 = vunpack.c.l.b16 %v415
    %v691 = vunpack.c.l.b16 %v416
    %v692 = vunpack.c.h.b16 %v416
    %v693 = vunpack.c.l.b16 %v417
    %v694 = vunpack.c.l.b16 %v418
    %v695 = vunpack.c.h.b16 %v418
    %v696 = vunpack.c.l.b16 %v419
    %v697 = vunpack.c.l.b16 %v420
    %v698 = vunpack.c.h.b16 %v420
    %v699 = vunpack.c.l.b16 %v421
    %v700 = vunpack.c.l.b16 %v422
    %v701 = vunpack.c.h.b16 %v422
    %v702 = vunpack.c.l.b16 %v423
    %v703 = vunpack.c.l.b16 %v424
    %v704 = vunpack.c.h.b16 %v424
    %v705 = vunpack.c.l.b16 %v425
    %v706 = vunpack.c.l.b16 %v426
    %v707 = vunpack.c.h.b16 %v426
    %v708 = vunpack.c.l.b16 %v427
    %v709 = vunpack.c.l.b16 %v428
    %v710 = vunpack.c.h.b16 %v428
    %v711 = vunpack.c.l.b16 %v429
    %v712 = vunpack.c.l.b16 %v430
    %v713 = vunpack.c.h.b16 %v430
    %v714 = vunpack.c.l.b16 %v431
    %v715 = vunpack.c.l.b16 %v432
    %v716 = vunpack.c.h.b16 %v432
    %v717 = vunpack.c.l.b16 %v433
    %v718 = vunpack.c.l.b16 %v434
    %v719 = vunpack.c.h.b16 %v434
    %v720 = vunpack.c.l.b16 %v435
    %v721 = vunpack.c.l.b16 %v436
    %v722 = vunpack.c.h.b16 %v436
    %v723 = vunpack.c.l.b16 %v437
    %v724 = vunpack.c.l.b16 %v438
    %v725 = vunpack.c.h.b16 %v438
    %v726 = vunpack.c.l.b16 %v439
    %v727 = vunpack.c.l.b16 %v440
    %v728 = vunpack.c.h.b16 %v440
    %v729 = vunpack.c.l.b16 %v441
    %v730 = vunpack.c.l.b16 %v442
    %v731 = vunpack.c.h.b16 %v442
    %v732 = vunpack.c.l.b16 %v443
    %v733 = vunpack.c.l.b16 %v444
    %v734 = vunpack.c.h.b16 %v444
    %v735 = vunpack.c.l.b16 %v445
    %v736 = vunpack.c.l.b16 %v446
    %v737 = vunpack.c.h.b16 %v446
    %v738 = vunpack.c.l.b16 %v447
    %v739 = vunpack.c.l.b16 %v448
    %v740 = vunpack.c.h.b16 %v448
    %v741 = vunpack.c.l.b16 %v449
    %v742 = vunpack.c.l.b16 %v450
    %v743 = vunpack.c.h.b16 %v450
    %v744 = vunpack.c.l.b16 %v451
    %v745 = vunpack.c.l.b16 %v452
    %v746 = vunpack.c.h.b16 %v452
    %v747 = vunpack.c.l.b16 %v453
    %v748 = vunpack.c.l.b16 %v454
    %v749 = vunpack.c.h.b16 %v454
    %v750 = vunpack.c.l.b16 %v455
    %v751 = vunpack.c.l.b16 %v456
    %v752 = vunpack.c.h.b16 %v456
    %v753 = vunpack.c.l.b16 %v457
    %v754 = vunpack.c.l.b16 %v458
    %v755 = vunpack.c.h.b16 %v458
    %v756 = vunpack.c.l.b16 %v459
    %v757 = vunpack.c.l.b16 %v460
    %v758 = vunpack.c.h.b16 %v460
    %v759 = vunpack.c.l.b16 %v461
    %v760 = vunpack.c.l.b16 %v462
    %v761 = vunpack.c.h.b16 %v462
    %v762 = vunpack.c.l.b16 %v463
    %v763 = vunpack.c.l.b16 %v464
    %v764 = vunpack.c.h.b16 %v464
    %v765 = vunpack.c.l.b16 %v465
    %v766 = vunpack.c.l.b16 %v466
    %v767 = vunpack.c.h.b16 %v466
    %v768 = vunpack.c.l.b16 %v467
    %v769 = vunpack.c.l.b16 %v468
    %v770 = vunpack.c.h.b16 %v468
    %v771 = vunpack.c.l.b16 %v469
    %v772 = vunpack.c.l.b16 %v470
    %v773 = vunpack.c.h.b16 %v470
    %v774 = vunpack.c.l.b16 %v471
    %v775 = vunpack.c.l.b16 %v472
    %v776 = vunpack.c.h.b16 %v472
    %v777 = vunpack.c.l.b16 %v473
    %v778 = vunpack.c.l.b16 %v474
    %v779 = vunpack.c.h.b16 %v474
    %v780 = vunpack.c.l.b16 %v475
    %v781 = vunpack.c.l.b16 %v476
    %v782 = vunpack.c.h.b16 %v476
    %v783 = vunpack.c.l.b16 %v477
    %v784 = vunpack.c.l.b16 %v478
    %v785 = vunpack.c.h.b16 %v478
    %v786 = vunpack.c.l.b16 %v479
    %v787 = vunpack.c.l.b16 %v480
    %v788 = vunpack.c.h.b16 %v480
    %v789 = vunpack.c.l.b16 %v481
    %v790 = vunpack.c.l.b16 %v482
    %v791 = vunpack.c.h.b16 %v482
    %v792 = vunpack.c.l.b16 %v483
    %v793 = vunpack.c.l.b16 %v484
    %v794 = vunpack.c.h.b16 %v484
    %v795 = vunpack.c.l.b16 %v485
    %v796 = vunpack.c.l.b16 %v486
    %v797 = vunpack.c.h.b16 %v486
    %v798 = vunpack.c.l.b16 %v487
    %v799 = vunpack.c.l.b16 %v488
    %v800 = vunpack.c.h.b16 %v488
    %v801 = vunpack.c.l.b16 %v489
    %v802 = vunpack.c.l.b16 %v490
    %v803 = vunpack.c.h.b16 %v490
    %v804 = vunpack.c.l.b16 %v491
    %v805 = vunpack.c.l.b16 %v492
    %v806 = vunpack.c.h.b16 %v492
    %v807 = vunpack.c.l.b16 %v493
    %v808 = vunpack.c.l.b16 %v494
    %v809 = vunpack.c.h.b16 %v494
    %v810 = vunpack.c.l.b16 %v495
    %v811 = vunpack.c.l.b16 %v496
    %v812 = vunpack.c.h.b16 %v496
    %v813 = vunpack.c.l.b16 %v497
    %v814 = vunpack.c.l.b16 %v498
    %v815 = vunpack.c.h.b16 %v498
    %v816 = vunpack.c.l.b16 %v499
    %v817 = vunpack.c.l.b16 %v500
    %v818 = vunpack.c.h.b16 %v500
    %v819 = vunpack.c.l.b16 %v501
    %v820 = vunpack.c.l.b16 %v502
    %v821 = vunpack.c.h.b16 %v502
    %v822 = vunpack.c.l.b16 %v503
    %v823 = vunpack.c.l.b16 %v504
    %v824 = vunpack.c.h.b16 %v504
    %v825 = vunpack.c.l.b16 %v505
    %v826 = vunpack.c.l.b16 %v506
    %v827 = vunpack.c.h.b16 %v506
    %v828 = vunpack.c.l.b16 %v507
    %v829 = vunpack.c.l.b16 %v508
    %v830 = vunpack.c.h.b16 %v508
    %v831 = vunpack.c.l.b16 %v509
    %v832 = vunpack.c.l.b16 %v510
    %v833 = vunpack.c.h.b16 %v510
    %v834 = vunpack.c.l.b16 %v511
    %v835 = vunpack.c.l.b16 %v512
    %v836 = vunpack.c.h.b16 %v512
    %v837 = vunpack.c.l.b16 %v513
    %v838 = vunpack.c.l.b16 %v514
    %v839 = vunpack.c.h.b16 %v514
    %v840 = vunpack.c.l.b16 %v515
    %v841 = vunpack.c.l.b16 %v516
    %v842 = vunpack.c.h.b16 %v516
    %v843 = vunpack.c.l.b16 %v517
    %v844 = vunpack.c.l.b16 %v518
    %v845 = vunpack.c.h.b16 %v518
    %v846 = vunpack.c.l.b16 %v519
    %v847 = vunpack.c.l.b16 %v520
    %v848 = vunpack.c.h.b16 %v520
    %v849 = vunpack.c.l.b16 %v521
    %v850 = vunpack.c.l.b16 %v522
    %v851 = vunpack.c.h.b16 %v522
    %v852 = vunpack.c.l.b16 %v523
    %v853 = vunpack.c.l.b16 %v524
    %v854 = vunpack.c.h.b16 %v524
    %v855 = vunpack.c.l.b16 %v525
    %v856 = vunpack.c.l.b16 %v526
    %v857 = vunpack.c.h.b16 %v526
    %v858 = vunpack.c.l.b16 %v527
    %v859 = vunpack.c.l.b16 %v528
    %v860 = vunpack.c.h.b16 %v528
    %v861 = vunpack.c.l.b16 %v529
    %v862 = vunpack.c.l.b16 %v530
    %v863 = vunpack.c.h.b16 %v530
    %v864 = vunpack.c.l.b16 %v531
    %v865 = vunpack.c.l.b16 %v532
    %v866 = vunpack.c.h.b16 %v532
    %v867 = vunpack.c.l.b16 %v533
    %v868 = vunpack.c.l.b16 %v534
    %v869 = vunpack.c.h.b16 %v534
    %v870 = vunpack.c.l.b16 %v535
    %v871 = vunpack.c.l.b16 %v536
    %v872 = vunpack.c.h.b16 %v536
    %v873 = vunpack.c.l.b16 %v537
    %v874 = vunpack.c.l.b16 %v538
    %v875 = vunpack.c.h.b16 %v538
    %v876 = vunpack.c.l.b16 %v539
    %v877 = vpack.c.b16 %v688, %v685
    %v878 = vpack.c.b16 %v689, %v686
    %v879 = vpack.c.b16 %v690, %v687
    %v880 = vpack.c.b16 %v694, %v691
    %v881 = vpack.c.b16 %v695, %v692
    %v882 = vpack.c.b16 %v696, %v693
    %v883 = vpack.c.b16 %v700, %v697
    %v884 = vpack.c.b16 %v701, %v698
    %v885 = vpack.c.b16 %v702, %v699
    %v886 = vpack.c.b16 %v706, %v703
    %v887 = vpack.c.b16 %v707, %v704
    %v888 = vpack.c.b16 %v708, %v705
    %v889 = vpack.c.b16 %v712, %v709
    %v890 = vpack.c.b16 %v713, %v710
    %v891 = vpack.c.b16 %v714, %v711
    %v892 = vpack.c.b16 %v718, %v715
    %v893 = vpack.c.b16 %v719, %v716
    %v894 = vpack.c.b16 %v720, %v717
    %v895 = vpack.c.b16 %v724, %v721
    %v896 = vpack.c.b16 %v725, %v722
    %v897 = vpack.c.b16 %v726, %v723
    %v898 = vpack.c.b16 %v730, %v727
    %v899 = vpack.c.b16 %v731, %v728
    %v900 = vpack.c.b16 %v732, %v729
    %v901 = vpack.c.b16 %v736, %v733
    %v902 = vpack.c.b16 %v737, %v734
    %v903 = vpack.c.b16 %v738, %v735
    %v904 = vpack.c.b16 %v742, %v739
    %v905 = vpack.c.b16 %v743, %v740
    %v906 = vpack.c.b16 %v744, %v741
    %v907 = vpack.c.b16 %v748, %v745
    %v908 = vpack.c.b16 %v749, %v746
    %v909 = vpack.c.b16 %v750, %v747
    %v910 = vpack.c.b16 %v754, %v751
    %v911 = vpack.c.b16 %v755, %v752
    %v912 = vpack.c.b16 %v756, %v753
    %v913 = vpack.c.b16 %v760, %v757
    %v914 = vpack.c.b16 %v761, %v758
    %v915 = vpack.c.b16 %v762, %v759
    %v916 = vpack.c.b16 %v766, %v763
    %v917 = vpack.c.b16 %v767, %v764
    %v918 = vpack.c.b16 %v768, %v765
    %v919 = vpack.c.b16 %v772, %v769
    %v920 = vpack.c.b16 %v773, %v770
    %v921 = vpack.c.b16 %v774, %v771
    %v922 = vpack.c.b16 %v778, %v775
    %v923 = vpack.c.b16 %v779, %v776
    %v924 = vpack.c.b16 %v780, %v777
    %v925 = vpack.c.b16 %v784, %v781
    %v926 = vpack.c.b16 %v785, %v782
    %v927 = vpack.c.b16 %v786, %v783
    %v928 = vpack.c.b16 %v790, %v787
    %v929 = vpack.c.b16 %v791, %v788
    %v930 = vpack.c.b16 %v792, %v789
    %v931 = vpack.c.b16 %v796, %v793
    %v932 = vpack.c.b16 %v797, %v794
    %v933 = vpack.c.b16 %v798, %v795
    %v934 = vpack.c.b16 %v802, %v799
    %v935 = vpack.c.b16 %v803, %v800
    %v936 = vpack.c.b16 %v804, %v801
    %v937 = vpack.c.b16 %v808, %v805
    %v938 = vpack.c.b16 %v809, %v806
    %v939 = vpack.c.b16 %v810, %v807
    %v940 = vpack.c.b16 %v814, %v811
    %v941 = vpack.c.b16 %v815, %v812
    %v942 = vpack.c.b16 %v816, %v813
    %v943 = vpack.c.b16 %v820, %v817
    %v944 = vpack.c.b16 %v821, %v818
    %v945 = vpack.c.b16 %v822, %v819
    %v946 = vpack.c.b16 %v826, %v823
    %v947 = vpack.c.b16 %v827, %v824
    %v948 = vpack.c.b16 %v828, %v825
    %v949 = vpack.c.b16 %v832, %v829
    %v950 = vpack.c.b16 %v833, %v830
    %v951 = vpack.c.b16 %v834, %v831
    %v952 = vpack.c.b16 %v838, %v835
    %v953 = vpack.c.b16 %v839, %v836
    %v954 = vpack.c.b16 %v840, %v837
    %v955 = vpack.c.b16 %v844, %v841
    %v956 = vpack.c.b16 %v845, %v842
    %v957 = vpack.c.b16 %v846, %v843
    %v958 = vpack.c.b16 %v850, %v847
    %v959 = vpack.c.b16 %v851, %v848
    %v960 = vpack.c.b16 %v852, %v849
    %v961 = vpack.c.b16 %v856, %v853
    %v962 = vpack.c.b16 %v857, %v854
    %v963 = vpack.c.b16 %v858, %v855
    %v964 = vpack.c.b16 %v862, %v859
    %v965 = vpack.c.b16 %v863, %v860
    %v966 = vpack.c.b16 %v864, %v861
    %v967 = vpack.c.b16 %v868, %v865
    %v968 = vpack.c.b16 %v869, %v866
    %v969 = vpack.c.b16 %v870, %v867
    %v970 = vpack.c.b16 %v874, %v871
    %v971 = vpack.c.b16 %v875, %v872
    %v972 = vpack.c.b16 %v876, %v873
    %1069 = vmatprep.subr.bf16.mxu0 %v878
    %1070 = vmatpush1.bf16.msra.mxu0 %v877
    %1071 = vmatprep.subr.bf16.mxu0 %v881
    %1072 = vmatpush1.bf16.msra.mxu0 %v880
    %1073 = vmatprep.subr.bf16.mxu0 %v884
    %1074 = vmatpush1.bf16.msra.mxu0 %v883
    %1075 = vmatprep.subr.bf16.mxu0 %v887
    %1076 = vmatpush1.bf16.msra.mxu0 %v886
    %1077 = vmatprep.subr.bf16.mxu0 %v890
    %1078 = vmatpush1.bf16.msra.mxu0 %v889
    %1079 = vmatprep.subr.bf16.mxu0 %v893
    %1080 = vmatpush1.bf16.msra.mxu0 %v892
    %1081 = vmatprep.subr.bf16.mxu0 %v896
    %1082 = vmatpush1.bf16.msra.mxu0 %v895
    %1083 = vmatprep.subr.bf16.mxu0 %v899
    %1084 = vmatpush1.bf16.msra.mxu0 %v898
    %1085 = vmatprep.subr.bf16.mxu0 %v902
    %1086 = vmatpush1.bf16.msra.mxu0 %v901
    %1087 = vmatprep.subr.bf16.mxu0 %v905
    %1088 = vmatpush1.bf16.msra.mxu0 %v904
    %1089 = vmatprep.subr.bf16.mxu0 %v908
    %1090 = vmatpush1.bf16.msra.mxu0 %v907
    %1091 = vmatprep.subr.bf16.mxu0 %v911
    %1092 = vmatpush1.bf16.msra.mxu0 %v910
    %1093 = vmatprep.subr.bf16.mxu0 %v914
    %1094 = vmatpush1.bf16.msra.mxu0 %v913
    %1095 = vmatprep.subr.bf16.mxu0 %v917
    %1096 = vmatpush1.bf16.msra.mxu0 %v916
    %1097 = vmatprep.subr.bf16.mxu0 %v920
    %1098 = vmatpush1.bf16.msra.mxu0 %v919
    %1099 = vmatprep.subr.bf16.mxu0 %v923
    %1100 = vmatpush1.bf16.msra.mxu0 %v922
    %1101 = vmatprep.mubr.bf16.mxu0 %v405
    %1102 = vmatmul.mubr.bf16.gmra.mrb[0].mxu0 %v404
    %v1103 = vpop.f32.mrb[0].mxu0
    %v1104 = vadd.f32 %v545, %v1103
    %v1105 = vpop.f32.mrb[0].mxu0
    %v1106 = vadd.f32 %v549, %v1105
    %v1107 = vpop.f32.mrb[0].mxu0
    %v1108 = vadd.f32 %v545, %v1107
    %v1109 = vpop.f32.mrb[0].mxu0
    %v1110 = vadd.f32 %v549, %v1109
    %1111 = vdwg.mxu0
    %1112 = vmatprep.subr.bf16.mxu0 %v926
    %1113 = vmatpush1.bf16.msra.mxu0 %v925
    %1114 = vmatprep.subr.bf16.mxu0 %v929
    %1115 = vmatpush1.bf16.msra.mxu0 %v928
    %1116 = vmatprep.subr.bf16.mxu0 %v932
    %1117 = vmatpush1.bf16.msra.mxu0 %v931
    %1118 = vmatprep.subr.bf16.mxu0 %v935
    %1119 = vmatpush1.bf16.msra.mxu0 %v934
    %1120 = vmatprep.subr.bf16.mxu0 %v938
    %1121 = vmatpush1.bf16.msra.mxu0 %v937
    %1122 = vmatprep.subr.bf16.mxu0 %v941
    %1123 = vmatpush1.bf16.msra.mxu0 %v940
    %1124 = vmatprep.subr.bf16.mxu0 %v944
    %1125 = vmatpush1.bf16.msra.mxu0 %v943
    %1126 = vmatprep.subr.bf16.mxu0 %v947
    %1127 = vmatpush1.bf16.msra.mxu0 %v946
    %1128 = vmatprep.subr.bf16.mxu0 %v950
    %1129 = vmatpush1.bf16.msra.mxu0 %v949
    %1130 = vmatprep.subr.bf16.mxu0 %v953
    %1131 = vmatpush1.bf16.msra.mxu0 %v952
    %1132 = vmatprep.subr.bf16.mxu0 %v956
    %1133 = vmatpush1.bf16.msra.mxu0 %v955
    %1134 = vmatprep.subr.bf16.mxu0 %v959
    %1135 = vmatpush1.bf16.msra.mxu0 %v958
    %1136 = vmatprep.subr.bf16.mxu0 %v962
    %1137 = vmatpush1.bf16.msra.mxu0 %v961
    %1138 = vmatprep.subr.bf16.mxu0 %v965
    %1139 = vmatpush1.bf16.msra.mxu0 %v964
    %1140 = vmatprep.subr.bf16.mxu0 %v968
    %1141 = vmatpush1.bf16.msra.mxu0 %v967
    %1142 = vmatprep.subr.bf16.mxu0 %v971
    %1143 = vmatpush1.bf16.msra.mxu0 %v970
    %1144 = vmatprep.mubr.bf16.mxu0 %v407
    %1145 = vmatmul.mubr.bf16.gmra.mrb[0].mxu0 %v406
    %v1146 = vpop.f32.mrb[0].mxu0
    %v1147 = vadd.f32 %v1104, %v1146
    %v1148 = vpop.f32.mrb[0].mxu0
    %v1149 = vadd.f32 %v1106, %v1148
    %v1150 = vpop.f32.mrb[0].mxu0
    %v1151 = vadd.f32 %v1108, %v1150
    %v1152 = vpop.f32.mrb[0].mxu0
    %v1153 = vadd.f32 %v1110, %v1152
    %1154 = vdwg.mxu0
    %1155 = vmatprep.subr.bf16.mxu0 0
    %1156 = vmatpush1.bf16.msra.mxu0 %v879
    %1157 = vmatprep.subr.bf16.mxu0 0
    %1158 = vmatpush1.bf16.msra.mxu0 %v882
    %1159 = vmatprep.subr.bf16.mxu0 0
    %1160 = vmatpush1.bf16.msra.mxu0 %v885
    %1161 = vmatprep.subr.bf16.mxu0 0
    %1162 = vmatpush1.bf16.msra.mxu0 %v888
    %1163 = vmatprep.subr.bf16.mxu0 0
    %1164 = vmatpush1.bf16.msra.mxu0 %v891
    %1165 = vmatprep.subr.bf16.mxu0 0
    %1166 = vmatpush1.bf16.msra.mxu0 %v894
    %1167 = vmatprep.subr.bf16.mxu0 0
    %1168 = vmatpush1.bf16.msra.mxu0 %v897
    %1169 = vmatprep.subr.bf16.mxu0 0
    %1170 = vmatpush1.bf16.msra.mxu0 %v900
    %1171 = vmatprep.subr.bf16.mxu0 0
    %1172 = vmatpush1.bf16.msra.mxu0 %v903
    %1173 = vmatprep.subr.bf16.mxu0 0
    %1174 = vmatpush1.bf16.msra.mxu0 %v906
    %1175 = vmatprep.subr.bf16.mxu0 0
    %1176 = vmatpush1.bf16.msra.mxu0 %v909
    %1177 = vmatprep.subr.bf16.mxu0 0
    %1178 = vmatpush1.bf16.msra.mxu0 %v912
    %1179 = vmatprep.subr.bf16.mxu0 0
    %1180 = vmatpush1.bf16.msra.mxu0 %v915
    %1181 = vmatprep.subr.bf16.mxu0 0
    %1182 = vmatpush1.bf16.msra.mxu0 %v918
    %1183 = vmatprep.subr.bf16.mxu0 0
    %1184 = vmatpush1.bf16.msra.mxu0 %v921
    %1185 = vmatprep.subr.bf16.mxu0 0
    %1186 = vmatpush1.bf16.msra.mxu0 %v924
    %1187 = vmatprep.mubr.bf16.mxu0 %v405
    %1188 = vmatmul.mubr.bf16.gmra.mrb[0].mxu0 %v404
    %v1189 = vpop.f32.mrb[0].mxu0
    %v1190 = vadd.f32 %v553, %v1189
    %v1191 = vpop.f32.mrb[0].mxu0
    %v1192 = vpop.f32.mrb[0].mxu0
    %v1193 = vadd.f32 %v553, %v1192
    %v1194 = vpop.f32.mrb[0].mxu0
    %1195 = vdwg.mxu0
    %1196 = vmatprep.subr.bf16.mxu0 0
    %1197 = vmatpush1.bf16.msra.mxu0 %v927
    %1198 = vmatprep.subr.bf16.mxu0 0
    %1199 = vmatpush1.bf16.msra.mxu0 %v930
    %1200 = vmatprep.subr.bf16.mxu0 0
    %1201 = vmatpush1.bf16.msra.mxu0 %v933
    %1202 = vmatprep.subr.bf16.mxu0 0
    %1203 = vmatpush1.bf16.msra.mxu0 %v936
    %1204 = vmatprep.subr.bf16.mxu0 0
    %1205 = vmatpush1.bf16.msra.mxu0 %v939
    %1206 = vmatprep.subr.bf16.mxu0 0
    %1207 = vmatpush1.bf16.msra.mxu0 %v942
    %1208 = vmatprep.subr.bf16.mxu0 0
    %1209 = vmatpush1.bf16.msra.mxu0 %v945
    %1210 = vmatprep.subr.bf16.mxu0 0
    %1211 = vmatpush1.bf16.msra.mxu0 %v948
    %1212 = vmatprep.subr.bf16.mxu0 0
    %1213 = vmatpush1.bf16.msra.mxu0 %v951
    %1214 = vmatprep.subr.bf16.mxu0 0
    %1215 = vmatpush1.bf16.msra.mxu0 %v954
    %1216 = vmatprep.subr.bf16.mxu0 0
    %1217 = vmatpush1.bf16.msra.mxu0 %v957
    %1218 = vmatprep.subr.bf16.mxu0 0
    %1219 = vmatpush1.bf16.msra.mxu0 %v960
    %1220 = vmatprep.subr.bf16.mxu0 0
    %1221 = vmatpush1.bf16.msra.mxu0 %v963
    %1222 = vmatprep.subr.bf16.mxu0 0
    %1223 = vmatpush1.bf16.msra.mxu0 %v966
    %1224 = vmatprep.subr.bf16.mxu0 0
    %1225 = vmatpush1.bf16.msra.mxu0 %v969
    %1226 = vmatprep.subr.bf16.mxu0 0
    %1227 = vmatpush1.bf16.msra.mxu0 %v972
    %1228 = vmatprep.mubr.bf16.mxu0 %v407
    %1229 = vmatmul.mubr.bf16.gmra.mrb[0].mxu0 %v406
    %v1230 = vpop.f32.mrb[0].mxu0
    %v1231 = vadd.f32 %v1190, %v1230
    %v1232 = vpop.f32.mrb[0].mxu0
    %v1233 = vpop.f32.mrb[0].mxu0
    %v1234 = vadd.f32 %v1193, %v1233
    %v1235 = vpop.f32.mrb[0].mxu0
    %1236 = vdwg.mxu0
    %v1237 = vmul.f32 %v1147, 0.01
    %v1238 = vmul.f32 %v1149, 0.01
    %v1239 = vmul.f32 %v1231, 0.01
    %v1240 = vmul.f32 %v1151, 0.01
    %v1241 = vmul.f32 %v1153, 0.01
    %v1242 = vmul.f32 %v1234, 0.01
    %v1243 = vmax.f32 %v1147, %v1237
    %v1244 = vmax.f32 %v1149, %v1238
    %v1245 = vmax.f32 %v1231, %v1239
    %v1246 = vmax.f32 %v1151, %v1240
    %v1247 = vmax.f32 %v1153, %v1241
    %v1248 = vmax.f32 %v1234, %v1242
    %v1249 = vld [vmem:[#allocation2 + $0xc] sm:$0xff]
    %v1250 = vld [vmem:[#allocation2 + $0x14] sm:$0xf]
    %v1251 = vld [vmem:[#allocation2 + $0x24] sm:$0xff]
    %v1252 = vld [vmem:[#allocation2 + $0x2c] sm:$0xf]
    %v1253 = vld [vmem:[#allocation2 + $0x3c] sm:$0xff]
    %v1254 = vld [vmem:[#allocation2 + $0x44] sm:$0xf]
    %v1255 = vld [vmem:[#allocation2 + $0x54] sm:$0xff]
    %v1256 = vld [vmem:[#allocation2 + $0x5c] sm:$0xf]
    %v1257 = vld [vmem:[#allocation2 + $0x6c] sm:$0xff]
    %v1258 = vld [vmem:[#allocation2 + $0x74] sm:$0xf]
    %v1259 = vld [vmem:[#allocation2 + $0x84] sm:$0xff]
    %v1260 = vld [vmem:[#allocation2 + $0x8c] sm:$0xf]
    %v1261 = vld [vmem:[#allocation2 + $0x9c] sm:$0xff]
    %v1262 = vld [vmem:[#allocation2 + $0xa4] sm:$0xf]
    %v1263 = vld [vmem:[#allocation2 + $0xb4] sm:$0xff]
    %v1264 = vld [vmem:[#allocation2 + $0xbc] sm:$0xf]
    %v1265 = vld [vmem:[#allocation2 + $0xcc] sm:$0xff]
    %v1266 = vld [vmem:[#allocation2 + $0xd4] sm:$0xf]
    %v1267 = vld [vmem:[#allocation2 + $0xe4] sm:$0xff]
    %v1268 = vld [vmem:[#allocation2 + $0xec] sm:$0xf]
    %v1269 = vld [vmem:[#allocation2 + $0xfc] sm:$0xff]
    %v1270 = vld [vmem:[#allocation2 + $0x104] sm:$0xf]
    %v1271 = vld [vmem:[#allocation2 + $0x114] sm:$0xff]
    %v1272 = vld [vmem:[#allocation2 + $0x11c] sm:$0xf]
    %v1273 = vld [vmem:[#allocation2 + $0x12c] sm:$0xff]
    %v1274 = vld [vmem:[#allocation2 + $0x134] sm:$0xf]
    %v1275 = vld [vmem:[#allocation2 + $0x144] sm:$0xff]
    %v1276 = vld [vmem:[#allocation2 + $0x14c] sm:$0xf]
    %v1277 = vld [vmem:[#allocation2 + $0x15c] sm:$0xff]
    %v1278 = vld [vmem:[#allocation2 + $0x164] sm:$0xf]
    %v1279 = vld [vmem:[#allocation2 + $0x174] sm:$0xff]
    %v1280 = vld [vmem:[#allocation2 + $0x17c] sm:$0xf]
    %v1281 = vld [vmem:[#allocation2 + $0x18c] sm:$0xff]
    %v1282 = vld [vmem:[#allocation2 + $0x194] sm:$0xf]
    %v1283 = vld [vmem:[#allocation2 + $0x1a4] sm:$0xff]
    %v1284 = vld [vmem:[#allocation2 + $0x1ac] sm:$0xf]
    %v1285 = vld [vmem:[#allocation2 + $0x1bc] sm:$0xff]
    %v1286 = vld [vmem:[#allocation2 + $0x1c4] sm:$0xf]
    %v1287 = vld [vmem:[#allocation2 + $0x1d4] sm:$0xff]
    %v1288 = vld [vmem:[#allocation2 + $0x1dc] sm:$0xf]
    %v1289 = vld [vmem:[#allocation2 + $0x1ec] sm:$0xff]
    %v1290 = vld [vmem:[#allocation2 + $0x1f4] sm:$0xf]
    %v1291 = vld [vmem:[#allocation2 + $0x204] sm:$0xff]
    %v1292 = vld [vmem:[#allocation2 + $0x20c] sm:$0xf]
    %v1293 = vld [vmem:[#allocation2 + $0x21c] sm:$0xff]
    %v1294 = vld [vmem:[#allocation2 + $0x224] sm:$0xf]
    %v1295 = vld [vmem:[#allocation2 + $0x234] sm:$0xff]
    %v1296 = vld [vmem:[#allocation2 + $0x23c] sm:$0xf]
    %v1297 = vld [vmem:[#allocation2 + $0x24c] sm:$0xff]
    %v1298 = vld [vmem:[#allocation2 + $0x254] sm:$0xf]
    %v1299 = vld [vmem:[#allocation2 + $0x264] sm:$0xff]
    %v1300 = vld [vmem:[#allocation2 + $0x26c] sm:$0xf]
    %v1301 = vld [vmem:[#allocation2 + $0x27c] sm:$0xff]
    %v1302 = vld [vmem:[#allocation2 + $0x284] sm:$0xf]
    %v1303 = vld [vmem:[#allocation2 + $0x294] sm:$0xff]
    %v1304 = vld [vmem:[#allocation2 + $0x29c] sm:$0xf]
    %v1305 = vld [vmem:[#allocation2 + $0x2ac] sm:$0xff]
    %v1306 = vld [vmem:[#allocation2 + $0x2b4] sm:$0xf]
    %v1307 = vld [vmem:[#allocation2 + $0x2c4] sm:$0xff]
    %v1308 = vld [vmem:[#allocation2 + $0x2cc] sm:$0xf]
    %v1309 = vld [vmem:[#allocation2 + $0x2dc] sm:$0xff]
    %v1310 = vld [vmem:[#allocation2 + $0x2e4] sm:$0xf]
    %v1311 = vld [vmem:[#allocation2 + $0x2f4] sm:$0xff]
    %v1312 = vld [vmem:[#allocation2 + $0x2fc] sm:$0xf]
    %v1313 = vld [vmem:[#allocation2 + $0x30c] sm:$0xff]
    %v1314 = vld [vmem:[#allocation2 + $0x314] sm:$0xf]
    %v1315 = vld [vmem:[#allocation2 + $0x324] sm:$0xff]
    %v1316 = vld [vmem:[#allocation2 + $0x32c] sm:$0xf]
    %v1317 = vld [vmem:[#allocation2 + $0x33c] sm:$0xff]
    %v1318 = vld [vmem:[#allocation2 + $0x344] sm:$0xf]
    %v1319 = vld [vmem:[#allocation2 + $0x354] sm:$0xff]
    %v1320 = vld [vmem:[#allocation2 + $0x35c] sm:$0xf]
    %v1321 = vld [vmem:[#allocation2 + $0x36c] sm:$0xff]
    %v1322 = vld [vmem:[#allocation2 + $0x374] sm:$0xf]
    %v1323 = vld [vmem:[#allocation2 + $0x384] sm:$0xff]
    %v1324 = vld [vmem:[#allocation2 + $0x38c] sm:$0xf]
    %v1325 = vld [vmem:[#allocation2 + $0x39c] sm:$0xff]
    %v1326 = vld [vmem:[#allocation2 + $0x3a4] sm:$0xf]
    %v1327 = vld [vmem:[#allocation2 + $0x3b4] sm:$0xff]
    %v1328 = vld [vmem:[#allocation2 + $0x3bc] sm:$0xf]
    %v1329 = vld [vmem:[#allocation2 + $0x3cc] sm:$0xff]
    %v1330 = vld [vmem:[#allocation2 + $0x3d4] sm:$0xf]
    %v1331 = vld [vmem:[#allocation2 + $0x3e4] sm:$0xff]
    %v1332 = vld [vmem:[#allocation2 + $0x3ec] sm:$0xf]
    %v1333 = vld [vmem:[#allocation2 + $0x3fc] sm:$0xff]
    %v1334 = vld [vmem:[#allocation2 + $0x404] sm:$0xf]
    %v1335 = vld [vmem:[#allocation2 + $0x414] sm:$0xff]
    %v1336 = vld [vmem:[#allocation2 + $0x41c] sm:$0xf]
    %v1337 = vld [vmem:[#allocation2 + $0x42c] sm:$0xff]
    %v1338 = vld [vmem:[#allocation2 + $0x434] sm:$0xf]
    %v1339 = vld [vmem:[#allocation2 + $0x444] sm:$0xff]
    %v1340 = vld [vmem:[#allocation2 + $0x44c] sm:$0xf]
    %v1341 = vld [vmem:[#allocation2 + $0x45c] sm:$0xff]
    %v1342 = vld [vmem:[#allocation2 + $0x464] sm:$0xf]
    %v1343 = vld [vmem:[#allocation2 + $0x474] sm:$0xff]
    %v1344 = vld [vmem:[#allocation2 + $0x47c] sm:$0xf]
    %v1345 = vld [vmem:[#allocation2 + $0x48c] sm:$0xff]
    %v1346 = vld [vmem:[#allocation2 + $0x494] sm:$0xf]
    %v1347 = vld [vmem:[#allocation2 + $0x4a4] sm:$0xff]
    %v1348 = vld [vmem:[#allocation2 + $0x4ac] sm:$0xf]
    %v1349 = vld [vmem:[#allocation2 + $0x4bc] sm:$0xff]
    %v1350 = vld [vmem:[#allocation2 + $0x4c4] sm:$0xf]
    %v1351 = vld [vmem:[#allocation2 + $0x4d4] sm:$0xff]
    %v1352 = vld [vmem:[#allocation2 + $0x4dc] sm:$0xf]
    %v1353 = vld [vmem:[#allocation2 + $0x4ec] sm:$0xff]
    %v1354 = vld [vmem:[#allocation2 + $0x4f4] sm:$0xf]
    %v1355 = vld [vmem:[#allocation2 + $0x504] sm:$0xff]
    %v1356 = vld [vmem:[#allocation2 + $0x50c] sm:$0xf]
    %v1357 = vld [vmem:[#allocation2 + $0x51c] sm:$0xff]
    %v1358 = vld [vmem:[#allocation2 + $0x524] sm:$0xf]
    %v1359 = vld [vmem:[#allocation2 + $0x534] sm:$0xff]
    %v1360 = vld [vmem:[#allocation2 + $0x53c] sm:$0xf]
    %v1361 = vld [vmem:[#allocation2 + $0x54c] sm:$0xff]
    %v1362 = vld [vmem:[#allocation2 + $0x554] sm:$0xf]
    %v1363 = vld [vmem:[#allocation2 + $0x564] sm:$0xff]
    %v1364 = vld [vmem:[#allocation2 + $0x56c] sm:$0xf]
    %v1365 = vld [vmem:[#allocation2 + $0x57c] sm:$0xff]
    %v1366 = vld [vmem:[#allocation2 + $0x584] sm:$0xf]
    %v1367 = vld [vmem:[#allocation2 + $0x594] sm:$0xff]
    %v1368 = vld [vmem:[#allocation2 + $0x59c] sm:$0xf]
    %v1369 = vld [vmem:[#allocation2 + $0x5ac] sm:$0xff]
    %v1370 = vld [vmem:[#allocation2 + $0x5b4] sm:$0xf]
    %v1371 = vld [vmem:[#allocation2 + $0x5c4] sm:$0xff]
    %v1372 = vld [vmem:[#allocation2 + $0x5cc] sm:$0xf]
    %v1373 = vld [vmem:[#allocation2 + $0x5dc] sm:$0xff]
    %v1374 = vld [vmem:[#allocation2 + $0x5e4] sm:$0xf]
    %v1375 = vld [vmem:[#allocation2 + $0x5f4] sm:$0xff]
    %v1376 = vld [vmem:[#allocation2 + $0x5fc] sm:$0xf]
    %v1377 = vld [vmem:[%s4 + $0xb] sm:$0x7]
    %v1379 = vlaneseq
    %v1380 = vshrl.u32 %v1379, 7
    %v1381 = vsub.s32 0, %v1380
    %v1382 = vrot.slane %v1377, %v1381
    %v1383 = vlaneseq
    %v1384 = vshrl.u32 %v1383, 7
    %v1385 = vsub.s32 1, %v1384
    %v1386 = vrot.slane %v1377, %v1385
    %v1387 = vlaneseq
    %v1388 = vshrl.u32 %v1387, 7
    %v1389 = vsub.s32 2, %v1388
    %v1390 = vrot.slane %v1377, %v1389
    %v1522 = vunpack.c.l.b16 %v1249
    %v1523 = vunpack.c.h.b16 %v1249
    %v1524 = vunpack.c.l.b16 %v1250
    %v1525 = vunpack.c.l.b16 %v1251
    %v1526 = vunpack.c.h.b16 %v1251
    %v1527 = vunpack.c.l.b16 %v1252
    %v1528 = vunpack.c.l.b16 %v1253
    %v1529 = vunpack.c.h.b16 %v1253
    %v1530 = vunpack.c.l.b16 %v1254
    %v1531 = vunpack.c.l.b16 %v1255
    %v1532 = vunpack.c.h.b16 %v1255
    %v1533 = vunpack.c.l.b16 %v1256
    %v1534 = vunpack.c.l.b16 %v1257
    %v1535 = vunpack.c.h.b16 %v1257
    %v1536 = vunpack.c.l.b16 %v1258
    %v1537 = vunpack.c.l.b16 %v1259
    %v1538 = vunpack.c.h.b16 %v1259
    %v1539 = vunpack.c.l.b16 %v1260
    %v1540 = vunpack.c.l.b16 %v1261
    %v1541 = vunpack.c.h.b16 %v1261
    %v1542 = vunpack.c.l.b16 %v1262
    %v1543 = vunpack.c.l.b16 %v1263
    %v1544 = vunpack.c.h.b16 %v1263
    %v1545 = vunpack.c.l.b16 %v1264
    %v1546 = vunpack.c.l.b16 %v1265
    %v1547 = vunpack.c.h.b16 %v1265
    %v1548 = vunpack.c.l.b16 %v1266
    %v1549 = vunpack.c.l.b16 %v1267
    %v1550 = vunpack.c.h.b16 %v1267
    %v1551 = vunpack.c.l.b16 %v1268
    %v1552 = vunpack.c.l.b16 %v1269
    %v1553 = vunpack.c.h.b16 %v1269
    %v1554 = vunpack.c.l.b16 %v1270
    %v1555 = vunpack.c.l.b16 %v1271
    %v1556 = vunpack.c.h.b16 %v1271
    %v1557 = vunpack.c.l.b16 %v1272
    %v1558 = vunpack.c.l.b16 %v1273
    %v1559 = vunpack.c.h.b16 %v1273
    %v1560 = vunpack.c.l.b16 %v1274
    %v1561 = vunpack.c.l.b16 %v1275
    %v1562 = vunpack.c.h.b16 %v1275
    %v1563 = vunpack.c.l.b16 %v1276
    %v1564 = vunpack.c.l.b16 %v1277
    %v1565 = vunpack.c.h.b16 %v1277
    %v1566 = vunpack.c.l.b16 %v1278
    %v1567 = vunpack.c.l.b16 %v1279
    %v1568 = vunpack.c.h.b16 %v1279
    %v1569 = vunpack.c.l.b16 %v1280
    %v1570 = vunpack.c.l.b16 %v1281
    %v1571 = vunpack.c.h.b16 %v1281
    %v1572 = vunpack.c.l.b16 %v1282
    %v1573 = vunpack.c.l.b16 %v1283
    %v1574 = vunpack.c.h.b16 %v1283
    %v1575 = vunpack.c.l.b16 %v1284
    %v1576 = vunpack.c.l.b16 %v1285
    %v1577 = vunpack.c.h.b16 %v1285
    %v1578 = vunpack.c.l.b16 %v1286
    %v1579 = vunpack.c.l.b16 %v1287
    %v1580 = vunpack.c.h.b16 %v1287
    %v1581 = vunpack.c.l.b16 %v1288
    %v1582 = vunpack.c.l.b16 %v1289
    %v1583 = vunpack.c.h.b16 %v1289
    %v1584 = vunpack.c.l.b16 %v1290
    %v1585 = vunpack.c.l.b16 %v1291
    %v1586 = vunpack.c.h.b16 %v1291
    %v1587 = vunpack.c.l.b16 %v1292
    %v1588 = vunpack.c.l.b16 %v1293
    %v1589 = vunpack.c.h.b16 %v1293
    %v1590 = vunpack.c.l.b16 %v1294
    %v1591 = vunpack.c.l.b16 %v1295
    %v1592 = vunpack.c.h.b16 %v1295
    %v1593 = vunpack.c.l.b16 %v1296
    %v1594 = vunpack.c.l.b16 %v1297
    %v1595 = vunpack.c.h.b16 %v1297
    %v1596 = vunpack.c.l.b16 %v1298
    %v1597 = vunpack.c.l.b16 %v1299
    %v1598 = vunpack.c.h.b16 %v1299
    %v1599 = vunpack.c.l.b16 %v1300
    %v1600 = vunpack.c.l.b16 %v1301
    %v1601 = vunpack.c.h.b16 %v1301
    %v1602 = vunpack.c.l.b16 %v1302
    %v1603 = vunpack.c.l.b16 %v1303
    %v1604 = vunpack.c.h.b16 %v1303
    %v1605 = vunpack.c.l.b16 %v1304
    %v1606 = vunpack.c.l.b16 %v1305
    %v1607 = vunpack.c.h.b16 %v1305
    %v1608 = vunpack.c.l.b16 %v1306
    %v1609 = vunpack.c.l.b16 %v1307
    %v1610 = vunpack.c.h.b16 %v1307
    %v1611 = vunpack.c.l.b16 %v1308
    %v1612 = vunpack.c.l.b16 %v1309
    %v1613 = vunpack.c.h.b16 %v1309
    %v1614 = vunpack.c.l.b16 %v1310
    %v1615 = vunpack.c.l.b16 %v1311
    %v1616 = vunpack.c.h.b16 %v1311
    %v1617 = vunpack.c.l.b16 %v1312
    %v1618 = vunpack.c.l.b16 %v1313
    %v1619 = vunpack.c.h.b16 %v1313
    %v1620 = vunpack.c.l.b16 %v1314
    %v1621 = vunpack.c.l.b16 %v1315
    %v1622 = vunpack.c.h.b16 %v1315
    %v1623 = vunpack.c.l.b16 %v1316
    %v1624 = vunpack.c.l.b16 %v1317
    %v1625 = vunpack.c.h.b16 %v1317
    %v1626 = vunpack.c.l.b16 %v1318
    %v1627 = vunpack.c.l.b16 %v1319
    %v1628 = vunpack.c.h.b16 %v1319
    %v1629 = vunpack.c.l.b16 %v1320
    %v1630 = vunpack.c.l.b16 %v1321
    %v1631 = vunpack.c.h.b16 %v1321
    %v1632 = vunpack.c.l.b16 %v1322
    %v1633 = vunpack.c.l.b16 %v1323
    %v1634 = vunpack.c.h.b16 %v1323
    %v1635 = vunpack.c.l.b16 %v1324
    %v1636 = vunpack.c.l.b16 %v1325
    %v1637 = vunpack.c.h.b16 %v1325
    %v1638 = vunpack.c.l.b16 %v1326
    %v1639 = vunpack.c.l.b16 %v1327
    %v1640 = vunpack.c.h.b16 %v1327
    %v1641 = vunpack.c.l.b16 %v1328
    %v1642 = vunpack.c.l.b16 %v1329
    %v1643 = vunpack.c.h.b16 %v1329
    %v1644 = vunpack.c.l.b16 %v1330
    %v1645 = vunpack.c.l.b16 %v1331
    %v1646 = vunpack.c.h.b16 %v1331
    %v1647 = vunpack.c.l.b16 %v1332
    %v1648 = vunpack.c.l.b16 %v1333
    %v1649 = vunpack.c.h.b16 %v1333
    %v1650 = vunpack.c.l.b16 %v1334
    %v1651 = vunpack.c.l.b16 %v1335
    %v1652 = vunpack.c.h.b16 %v1335
    %v1653 = vunpack.c.l.b16 %v1336
    %v1654 = vunpack.c.l.b16 %v1337
    %v1655 = vunpack.c.h.b16 %v1337
    %v1656 = vunpack.c.l.b16 %v1338
    %v1657 = vunpack.c.l.b16 %v1339
    %v1658 = vunpack.c.h.b16 %v1339
    %v1659 = vunpack.c.l.b16 %v1340
    %v1660 = vunpack.c.l.b16 %v1341
    %v1661 = vunpack.c.h.b16 %v1341
    %v1662 = vunpack.c.l.b16 %v1342
    %v1663 = vunpack.c.l.b16 %v1343
    %v1664 = vunpack.c.h.b16 %v1343
    %v1665 = vunpack.c.l.b16 %v1344
    %v1666 = vunpack.c.l.b16 %v1345
    %v1667 = vunpack.c.h.b16 %v1345
    %v1668 = vunpack.c.l.b16 %v1346
    %v1669 = vunpack.c.l.b16 %v1347
    %v1670 = vunpack.c.h.b16 %v1347
    %v1671 = vunpack.c.l.b16 %v1348
    %v1672 = vunpack.c.l.b16 %v1349
    %v1673 = vunpack.c.h.b16 %v1349
    %v1674 = vunpack.c.l.b16 %v1350
    %v1675 = vunpack.c.l.b16 %v1351
    %v1676 = vunpack.c.h.b16 %v1351
    %v1677 = vunpack.c.l.b16 %v1352
    %v1678 = vunpack.c.l.b16 %v1353
    %v1679 = vunpack.c.h.b16 %v1353
    %v1680 = vunpack.c.l.b16 %v1354
    %v1681 = vunpack.c.l.b16 %v1355
    %v1682 = vunpack.c.h.b16 %v1355
    %v1683 = vunpack.c.l.b16 %v1356
    %v1684 = vunpack.c.l.b16 %v1357
    %v1685 = vunpack.c.h.b16 %v1357
    %v1686 = vunpack.c.l.b16 %v1358
    %v1687 = vunpack.c.l.b16 %v1359
    %v1688 = vunpack.c.h.b16 %v1359
    %v1689 = vunpack.c.l.b16 %v1360
    %v1690 = vunpack.c.l.b16 %v1361
    %v1691 = vunpack.c.h.b16 %v1361
    %v1692 = vunpack.c.l.b16 %v1362
    %v1693 = vunpack.c.l.b16 %v1363
    %v1694 = vunpack.c.h.b16 %v1363
    %v1695 = vunpack.c.l.b16 %v1364
    %v1696 = vunpack.c.l.b16 %v1365
    %v1697 = vunpack.c.h.b16 %v1365
    %v1698 = vunpack.c.l.b16 %v1366
    %v1699 = vunpack.c.l.b16 %v1367
    %v1700 = vunpack.c.h.b16 %v1367
    %v1701 = vunpack.c.l.b16 %v1368
    %v1702 = vunpack.c.l.b16 %v1369
    %v1703 = vunpack.c.h.b16 %v1369
    %v1704 = vunpack.c.l.b16 %v1370
    %v1705 = vunpack.c.l.b16 %v1371
    %v1706 = vunpack.c.h.b16 %v1371
    %v1707 = vunpack.c.l.b16 %v1372
    %v1708 = vunpack.c.l.b16 %v1373
    %v1709 = vunpack.c.h.b16 %v1373
    %v1710 = vunpack.c.l.b16 %v1374
    %v1711 = vunpack.c.l.b16 %v1375
    %v1712 = vunpack.c.h.b16 %v1375
    %v1713 = vunpack.c.l.b16 %v1376
    %v1714 = vpack.c.b16 %v1525, %v1522
    %v1715 = vpack.c.b16 %v1526, %v1523
    %v1716 = vpack.c.b16 %v1527, %v1524
    %v1717 = vpack.c.b16 %v1531, %v1528
    %v1718 = vpack.c.b16 %v1532, %v1529
    %v1719 = vpack.c.b16 %v1533, %v1530
    %v1720 = vpack.c.b16 %v1537, %v1534
    %v1721 = vpack.c.b16 %v1538, %v1535
    %v1722 = vpack.c.b16 %v1539, %v1536
    %v1723 = vpack.c.b16 %v1543, %v1540
    %v1724 = vpack.c.b16 %v1544, %v1541
    %v1725 = vpack.c.b16 %v1545, %v1542
    %v1726 = vpack.c.b16 %v1549, %v1546
    %v1727 = vpack.c.b16 %v1550, %v1547
    %v1728 = vpack.c.b16 %v1551, %v1548
    %v1729 = vpack.c.b16 %v1555, %v1552
    %v1730 = vpack.c.b16 %v1556, %v1553
    %v1731 = vpack.c.b16 %v1557, %v1554
    %v1732 = vpack.c.b16 %v1561, %v1558
    %v1733 = vpack.c.b16 %v1562, %v1559
    %v1734 = vpack.c.b16 %v1563, %v1560
    %v1735 = vpack.c.b16 %v1567, %v1564
    %v1736 = vpack.c.b16 %v1568, %v1565
    %v1737 = vpack.c.b16 %v1569, %v1566
    %v1738 = vpack.c.b16 %v1573, %v1570
    %v1739 = vpack.c.b16 %v1574, %v1571
    %v1740 = vpack.c.b16 %v1575, %v1572
    %v1741 = vpack.c.b16 %v1579, %v1576
    %v1742 = vpack.c.b16 %v1580, %v1577
    %v1743 = vpack.c.b16 %v1581, %v1578
    %v1744 = vpack.c.b16 %v1585, %v1582
    %v1745 = vpack.c.b16 %v1586, %v1583
    %v1746 = vpack.c.b16 %v1587, %v1584
    %v1747 = vpack.c.b16 %v1591, %v1588
    %v1748 = vpack.c.b16 %v1592, %v1589
    %v1749 = vpack.c.b16 %v1593, %v1590
    %v1750 = vpack.c.b16 %v1597, %v1594
    %v1751 = vpack.c.b16 %v1598, %v1595
    %v1752 = vpack.c.b16 %v1599, %v1596
    %v1753 = vpack.c.b16 %v1603, %v1600
    %v1754 = vpack.c.b16 %v1604, %v1601
    %v1755 = vpack.c.b16 %v1605, %v1602
    %v1756 = vpack.c.b16 %v1609, %v1606
    %v1757 = vpack.c.b16 %v1610, %v1607
    %v1758 = vpack.c.b16 %v1611, %v1608
    %v1759 = vpack.c.b16 %v1615, %v1612
    %v1760 = vpack.c.b16 %v1616, %v1613
    %v1761 = vpack.c.b16 %v1617, %v1614
    %v1762 = vpack.c.b16 %v1621, %v1618
    %v1763 = vpack.c.b16 %v1622, %v1619
    %v1764 = vpack.c.b16 %v1623, %v1620
    %v1765 = vpack.c.b16 %v1627, %v1624
    %v1766 = vpack.c.b16 %v1628, %v1625
    %v1767 = vpack.c.b16 %v1629, %v1626
    %v1768 = vpack.c.b16 %v1633, %v1630
    %v1769 = vpack.c.b16 %v1634, %v1631
    %v1770 = vpack.c.b16 %v1635, %v1632
    %v1771 = vpack.c.b16 %v1639, %v1636
    %v1772 = vpack.c.b16 %v1640, %v1637
    %v1773 = vpack.c.b16 %v1641, %v1638
    %v1774 = vpack.c.b16 %v1645, %v1642
    %v1775 = vpack.c.b16 %v1646, %v1643
    %v1776 = vpack.c.b16 %v1647, %v1644
    %v1777 = vpack.c.b16 %v1651, %v1648
    %v1778 = vpack.c.b16 %v1652, %v1649
    %v1779 = vpack.c.b16 %v1653, %v1650
    %v1780 = vpack.c.b16 %v1657, %v1654
    %v1781 = vpack.c.b16 %v1658, %v1655
    %v1782 = vpack.c.b16 %v1659, %v1656
    %v1783 = vpack.c.b16 %v1663, %v1660
    %v1784 = vpack.c.b16 %v1664, %v1661
    %v1785 = vpack.c.b16 %v1665, %v1662
    %v1786 = vpack.c.b16 %v1669, %v1666
    %v1787 = vpack.c.b16 %v1670, %v1667
    %v1788 = vpack.c.b16 %v1671, %v1668
    %v1789 = vpack.c.b16 %v1675, %v1672
    %v1790 = vpack.c.b16 %v1676, %v1673
    %v1791 = vpack.c.b16 %v1677, %v1674
    %v1792 = vpack.c.b16 %v1681, %v1678
    %v1793 = vpack.c.b16 %v1682, %v1679
    %v1794 = vpack.c.b16 %v1683, %v1680
    %v1795 = vpack.c.b16 %v1687, %v1684
    %v1796 = vpack.c.b16 %v1688, %v1685
    %v1797 = vpack.c.b16 %v1689, %v1686
    %v1798 = vpack.c.b16 %v1693, %v1690
    %v1799 = vpack.c.b16 %v1694, %v1691
    %v1800 = vpack.c.b16 %v1695, %v1692
    %v1801 = vpack.c.b16 %v1699, %v1696
    %v1802 = vpack.c.b16 %v1700, %v1697
    %v1803 = vpack.c.b16 %v1701, %v1698
    %v1804 = vpack.c.b16 %v1705, %v1702
    %v1805 = vpack.c.b16 %v1706, %v1703
    %v1806 = vpack.c.b16 %v1707, %v1704
    %v1807 = vpack.c.b16 %v1711, %v1708
    %v1808 = vpack.c.b16 %v1712, %v1709
    %v1809 = vpack.c.b16 %v1713, %v1710
    %1906 = vmatprep.subr.bf16.mxu0 %v1715
    %1907 = vmatpush1.bf16.msra.mxu0 %v1714
    %1908 = vmatprep.subr.bf16.mxu0 %v1718
    %1909 = vmatpush1.bf16.msra.mxu0 %v1717
    %1910 = vmatprep.subr.bf16.mxu0 %v1721
    %1911 = vmatpush1.bf16.msra.mxu0 %v1720
    %1912 = vmatprep.subr.bf16.mxu0 %v1724
    %1913 = vmatpush1.bf16.msra.mxu0 %v1723
    %1914 = vmatprep.subr.bf16.mxu0 %v1727
    %1915 = vmatpush1.bf16.msra.mxu0 %v1726
    %1916 = vmatprep.subr.bf16.mxu0 %v1730
    %1917 = vmatpush1.bf16.msra.mxu0 %v1729
    %1918 = vmatprep.subr.bf16.mxu0 %v1733
    %1919 = vmatpush1.bf16.msra.mxu0 %v1732
    %1920 = vmatprep.subr.bf16.mxu0 %v1736
    %1921 = vmatpush1.bf16.msra.mxu0 %v1735
    %1922 = vmatprep.subr.bf16.mxu0 %v1739
    %1923 = vmatpush1.bf16.msra.mxu0 %v1738
    %1924 = vmatprep.subr.bf16.mxu0 %v1742
    %1925 = vmatpush1.bf16.msra.mxu0 %v1741
    %1926 = vmatprep.subr.bf16.mxu0 %v1745
    %1927 = vmatpush1.bf16.msra.mxu0 %v1744
    %1928 = vmatprep.subr.bf16.mxu0 %v1748
    %1929 = vmatpush1.bf16.msra.mxu0 %v1747
    %1930 = vmatprep.subr.bf16.mxu0 %v1751
    %1931 = vmatpush1.bf16.msra.mxu0 %v1750
    %1932 = vmatprep.subr.bf16.mxu0 %v1754
    %1933 = vmatpush1.bf16.msra.mxu0 %v1753
    %1934 = vmatprep.subr.bf16.mxu0 %v1757
    %1935 = vmatpush1.bf16.msra.mxu0 %v1756
    %1936 = vmatprep.subr.bf16.mxu0 %v1760
    %1937 = vmatpush1.bf16.msra.mxu0 %v1759
    %1938 = vmatprep.mubr.bf16.mxu0 %v409
    %1939 = vmatmul.mubr.bf16.gmra.mrb[0].mxu0 %v408
    %v1940 = vpop.f32.mrb[0].mxu0
    %v1941 = vadd.f32 %v1382, %v1940
    %v1942 = vpop.f32.mrb[0].mxu0
    %v1943 = vadd.f32 %v1386, %v1942
    %v1944 = vpop.f32.mrb[0].mxu0
    %v1945 = vadd.f32 %v1382, %v1944
    %v1946 = vpop.f32.mrb[0].mxu0
    %v1947 = vadd.f32 %v1386, %v1946
    %1948 = vdwg.mxu0
    %1949 = vmatprep.subr.bf16.mxu0 %v1763
    %1950 = vmatpush1.bf16.msra.mxu0 %v1762
    %1951 = vmatprep.subr.bf16.mxu0 %v1766
    %1952 = vmatpush1.bf16.msra.mxu0 %v1765
    %1953 = vmatprep.subr.bf16.mxu0 %v1769
    %1954 = vmatpush1.bf16.msra.mxu0 %v1768
    %1955 = vmatprep.subr.bf16.mxu0 %v1772
    %1956 = vmatpush1.bf16.msra.mxu0 %v1771
    %1957 = vmatprep.subr.bf16.mxu0 %v1775
    %1958 = vmatpush1.bf16.msra.mxu0 %v1774
    %1959 = vmatprep.subr.bf16.mxu0 %v1778
    %1960 = vmatpush1.bf16.msra.mxu0 %v1777
    %1961 = vmatprep.subr.bf16.mxu0 %v1781
    %1962 = vmatpush1.bf16.msra.mxu0 %v1780
    %1963 = vmatprep.subr.bf16.mxu0 %v1784
    %1964 = vmatpush1.bf16.msra.mxu0 %v1783
    %1965 = vmatprep.subr.bf16.mxu0 %v1787
    %1966 = vmatpush1.bf16.msra.mxu0 %v1786
    %1967 = vmatprep.subr.bf16.mxu0 %v1790
    %1968 = vmatpush1.bf16.msra.mxu0 %v1789
    %1969 = vmatprep.subr.bf16.mxu0 %v1793
    %1970 = vmatpush1.bf16.msra.mxu0 %v1792
    %1971 = vmatprep.subr.bf16.mxu0 %v1796
    %1972 = vmatpush1.bf16.msra.mxu0 %v1795
    %1973 = vmatprep.subr.bf16.mxu0 %v1799
    %1974 = vmatpush1.bf16.msra.mxu0 %v1798
    %1975 = vmatprep.subr.bf16.mxu0 %v1802
    %1976 = vmatpush1.bf16.msra.mxu0 %v1801
    %1977 = vmatprep.subr.bf16.mxu0 %v1805
    %1978 = vmatpush1.bf16.msra.mxu0 %v1804
    %1979 = vmatprep.subr.bf16.mxu0 %v1808
    %1980 = vmatpush1.bf16.msra.mxu0 %v1807
    %1981 = vmatprep.mubr.bf16.mxu0 %v411
    %1982 = vmatmul.mubr.bf16.gmra.mrb[0].mxu0 %v410
    %v1983 = vpop.f32.mrb[0].mxu0
    %v1984 = vadd.f32 %v1941, %v1983
    %v1985 = vpop.f32.mrb[0].mxu0
    %v1986 = vadd.f32 %v1943, %v1985
    %v1987 = vpop.f32.mrb[0].mxu0
    %v1988 = vadd.f32 %v1945, %v1987
    %v1989 = vpop.f32.mrb[0].mxu0
    %v1990 = vadd.f32 %v1947, %v1989
    %1991 = vdwg.mxu0
    %1992 = vmatprep.subr.bf16.mxu0 0
    %1993 = vmatpush1.bf16.msra.mxu0 %v1716
    %1994 = vmatprep.subr.bf16.mxu0 0
    %1995 = vmatpush1.bf16.msra.mxu0 %v1719
    %1996 = vmatprep.subr.bf16.mxu0 0
    %1997 = vmatpush1.bf16.msra.mxu0 %v1722
    %1998 = vmatprep.subr.bf16.mxu0 0
    %1999 = vmatpush1.bf16.msra.mxu0 %v1725
    %2000 = vmatprep.subr.bf16.mxu0 0
    %2001 = vmatpush1.bf16.msra.mxu0 %v1728
    %2002 = vmatprep.subr.bf16.mxu0 0
    %2003 = vmatpush1.bf16.msra.mxu0 %v1731
    %2004 = vmatprep.subr.bf16.mxu0 0
    %2005 = vmatpush1.bf16.msra.mxu0 %v1734
    %2006 = vmatprep.subr.bf16.mxu0 0
    %2007 = vmatpush1.bf16.msra.mxu0 %v1737
    %2008 = vmatprep.subr.bf16.mxu0 0
    %2009 = vmatpush1.bf16.msra.mxu0 %v1740
    %2010 = vmatprep.subr.bf16.mxu0 0
    %2011 = vmatpush1.bf16.msra.mxu0 %v1743
    %2012 = vmatprep.subr.bf16.mxu0 0
    %2013 = vmatpush1.bf16.msra.mxu0 %v1746
    %2014 = vmatprep.subr.bf16.mxu0 0
    %2015 = vmatpush1.bf16.msra.mxu0 %v1749
    %2016 = vmatprep.subr.bf16.mxu0 0
    %2017 = vmatpush1.bf16.msra.mxu0 %v1752
    %2018 = vmatprep.subr.bf16.mxu0 0
    %2019 = vmatpush1.bf16.msra.mxu0 %v1755
    %2020 = vmatprep.subr.bf16.mxu0 0
    %2021 = vmatpush1.bf16.msra.mxu0 %v1758
    %2022 = vmatprep.subr.bf16.mxu0 0
    %2023 = vmatpush1.bf16.msra.mxu0 %v1761
    %2024 = vmatprep.mubr.bf16.mxu0 %v409
    %2025 = vmatmul.mubr.bf16.gmra.mrb[0].mxu0 %v408
    %v2026 = vpop.f32.mrb[0].mxu0
    %v2027 = vadd.f32 %v1390, %v2026
    %v2028 = vpop.f32.mrb[0].mxu0
    %v2029 = vpop.f32.mrb[0].mxu0
    %v2030 = vadd.f32 %v1390, %v2029
    %v2031 = vpop.f32.mrb[0].mxu0
    %2032 = vdwg.mxu0
    %2033 = vmatprep.subr.bf16.mxu0 0
    %2034 = vmatpush1.bf16.msra.mxu0 %v1764
    %2035 = vmatprep.subr.bf16.mxu0 0
    %2036 = vmatpush1.bf16.msra.mxu0 %v1767
    %2037 = vmatprep.subr.bf16.mxu0 0
    %2038 = vmatpush1.bf16.msra.mxu0 %v1770
    %2039 = vmatprep.subr.bf16.mxu0 0
    %2040 = vmatpush1.bf16.msra.mxu0 %v1773
    %2041 = vmatprep.subr.bf16.mxu0 0
    %2042 = vmatpush1.bf16.msra.mxu0 %v1776
    %2043 = vmatprep.subr.bf16.mxu0 0
    %2044 = vmatpush1.bf16.msra.mxu0 %v1779
    %2045 = vmatprep.subr.bf16.mxu0 0
    %2046 = vmatpush1.bf16.msra.mxu0 %v1782
    %2047 = vmatprep.subr.bf16.mxu0 0
    %2048 = vmatpush1.bf16.msra.mxu0 %v1785
    %2049 = vmatprep.subr.bf16.mxu0 0
    %2050 = vmatpush1.bf16.msra.mxu0 %v1788
    %2051 = vmatprep.subr.bf16.mxu0 0
    %2052 = vmatpush1.bf16.msra.mxu0 %v1791
    %2053 = vmatprep.subr.bf16.mxu0 0
    %2054 = vmatpush1.bf16.msra.mxu0 %v1794
    %2055 = vmatprep.subr.bf16.mxu0 0
    %2056 = vmatpush1.bf16.msra.mxu0 %v1797
    %2057 = vmatprep.subr.bf16.mxu0 0
    %2058 = vmatpush1.bf16.msra.mxu0 %v1800
    %2059 = vmatprep.subr.bf16.mxu0 0
    %2060 = vmatpush1.bf16.msra.mxu0 %v1803
    %2061 = vmatprep.subr.bf16.mxu0 0
    %2062 = vmatpush1.bf16.msra.mxu0 %v1806
    %2063 = vmatprep.subr.bf16.mxu0 0
    %2064 = vmatpush1.bf16.msra.mxu0 %v1809
    %2065 = vmatprep.mubr.bf16.mxu0 %v411
    %2066 = vmatmul.mubr.bf16.gmra.mrb[0].mxu0 %v410
    %v2067 = vpop.f32.mrb[0].mxu0
    %v2068 = vadd.f32 %v2027, %v2067
    %v2069 = vpop.f32.mrb[0].mxu0
    %v2070 = vpop.f32.mrb[0].mxu0
    %v2071 = vadd.f32 %v2030, %v2070
    %v2072 = vpop.f32.mrb[0].mxu0
    %2073 = vdwg.mxu0
    %v2074 = vmul.f32 %v1984, 0.01
    %v2075 = vmul.f32 %v1986, 0.01
    %v2076 = vmul.f32 %v2068, 0.01
    %v2077 = vmul.f32 %v1988, 0.01
    %v2078 = vmul.f32 %v1990, 0.01
    %v2079 = vmul.f32 %v2071, 0.01
    %v2080 = vmax.f32 %v1984, %v2074
    %v2081 = vmax.f32 %v1986, %v2075
    %v2082 = vmax.f32 %v2068, %v2076
    %v2083 = vmax.f32 %v1988, %v2077
    %v2084 = vmax.f32 %v1990, %v2078
    %v2085 = vmax.f32 %v2071, %v2079
    %v2086 = vpack.c.bf16 %v1246, %v1243
    %v2087 = vpack.c.bf16 %v1247, %v1244
    %v2088 = vpack.c.bf16 %v1248, %v1245
    %v2089 = vld [vmem:[%s3] sm:$0xf]
    %v2090 = vld [vmem:[%s3 + $0x4] sm:$0xf]
    %v2091 = vld [vmem:[%s3 + $0x8] sm:$0xf]
    %v2092 = vld [vmem:[%s3 + $0xc] sm:$0xf]
    %v2093 = vld [vmem:[%s3 + $0x10] sm:$0xf]
    %v2094 = vld [vmem:[%s3 + $0x14] sm:$0xf]
    %v2095 = vld [vmem:[%s3 + $0x18] sm:$0xf]
    %v2096 = vld [vmem:[%s3 + $0x1c] sm:$0xf]
    %v2097 = vld [vmem:[%s3 + $0x20] sm:$0xf]
    %v2098 = vld [vmem:[%s3 + $0x24] sm:$0xf]
    %v2099 = vld [vmem:[%s3 + $0x28] sm:$0xf]
    %v2100 = vld [vmem:[%s3 + $0x2c] sm:$0xf]
    %v2101 = vld [vmem:[%s3 + $0x30] sm:$0xf]
    %v2102 = vld [vmem:[%s3 + $0x34] sm:$0xf]
    %v2103 = vld [vmem:[%s3 + $0x38] sm:$0xf]
    %v2104 = vld [vmem:[%s3 + $0x3c] sm:$0xf]
    %v2105 = vld [vmem:[%s3 + $0x40] sm:$0xf]
    %v2106 = vld [vmem:[%s3 + $0x44] sm:$0xf]
    %v2107 = vld [vmem:[%s3 + $0x48] sm:$0xf]
    %v2108 = vld [vmem:[%s3 + $0x4c] sm:$0xf]
    %v2109 = vld [vmem:[%s3 + $0x50] sm:$0xf]
    %v2110 = vld [vmem:[%s3 + $0x54] sm:$0xf]
    %v2111 = vld [vmem:[%s3 + $0x58] sm:$0xf]
    %v2112 = vld [vmem:[%s3 + $0x5c] sm:$0xf]
    %v2113 = vld [vmem:[%s3 + $0x60] sm:$0xf]
    %v2114 = vld [vmem:[%s3 + $0x64] sm:$0xf]
    %v2115 = vld [vmem:[%s3 + $0x68] sm:$0xf]
    %v2116 = vld [vmem:[%s3 + $0x6c] sm:$0xf]
    %v2117 = vld [vmem:[%s3 + $0x70] sm:$0xf]
    %v2118 = vld [vmem:[%s3 + $0x74] sm:$0xf]
    %v2119 = vld [vmem:[%s3 + $0x78] sm:$0xf]
    %v2120 = vld [vmem:[%s3 + $0x7c] sm:$0xf]
    %v2121 = vld [vmem:[%s3 + $0x80] sm:$0xf]
    %v2122 = vld [vmem:[%s3 + $0x84] sm:$0xf]
    %v2123 = vld [vmem:[%s3 + $0x88] sm:$0xf]
    %v2124 = vld [vmem:[%s3 + $0x8c] sm:$0xf]
    %v2125 = vld [vmem:[%s3 + $0x90] sm:$0xf]
    %v2126 = vld [vmem:[%s3 + $0x94] sm:$0xf]
    %v2127 = vld [vmem:[%s3 + $0x98] sm:$0xf]
    %v2128 = vld [vmem:[%s3 + $0x9c] sm:$0xf]
    %v2129 = vld [vmem:[%s3 + $0xa0] sm:$0xf]
    %v2130 = vld [vmem:[%s3 + $0xa4] sm:$0xf]
    %v2131 = vld [vmem:[%s3 + $0xa8] sm:$0xf]
    %v2132 = vld [vmem:[%s3 + $0xac] sm:$0xf]
    %v2133 = vld [vmem:[%s3 + $0xb0] sm:$0xf]
    %v2134 = vld [vmem:[%s3 + $0xb4] sm:$0xf]
    %v2135 = vld [vmem:[%s3 + $0xb8] sm:$0xf]
    %v2136 = vld [vmem:[%s3 + $0xbc] sm:$0xf]
    %v2137 = vpack.c.bf16 %v2083, %v2080
    %v2138 = vpack.c.bf16 %v2084, %v2081
    %v2139 = vpack.c.bf16 %v2085, %v2082
    %v2140 = vld [vmem:[%s3 + $0xc0] sm:$0xf]
    %v2141 = vld [vmem:[%s3 + $0xc4] sm:$0xf]
    %v2142 = vld [vmem:[%s3 + $0xc8] sm:$0xf]
    %v2143 = vld [vmem:[%s3 + $0xcc] sm:$0xf]
    %v2144 = vld [vmem:[%s3 + $0xd0] sm:$0xf]
    %v2145 = vld [vmem:[%s3 + $0xd4] sm:$0xf]
    %v2146 = vld [vmem:[%s3 + $0xd8] sm:$0xf]
    %v2147 = vld [vmem:[%s3 + $0xdc] sm:$0xf]
    %v2148 = vld [vmem:[%s3 + $0xe0] sm:$0xf]
    %v2149 = vld [vmem:[%s3 + $0xe4] sm:$0xf]
    %v2150 = vld [vmem:[%s3 + $0xe8] sm:$0xf]
    %v2151 = vld [vmem:[%s3 + $0xec] sm:$0xf]
    %v2152 = vld [vmem:[%s3 + $0xf0] sm:$0xf]
    %v2153 = vld [vmem:[%s3 + $0xf4] sm:$0xf]
    %v2154 = vld [vmem:[%s3 + $0xf8] sm:$0xf]
    %v2155 = vld [vmem:[%s3 + $0xfc] sm:$0xf]
    %v2156 = vld [vmem:[%s3 + $0x100] sm:$0xf]
    %v2157 = vld [vmem:[%s3 + $0x104] sm:$0xf]
    %v2158 = vld [vmem:[%s3 + $0x108] sm:$0xf]
    %v2159 = vld [vmem:[%s3 + $0x10c] sm:$0xf]
    %v2160 = vld [vmem:[%s3 + $0x110] sm:$0xf]
    %v2161 = vld [vmem:[%s3 + $0x114] sm:$0xf]
    %v2162 = vld [vmem:[%s3 + $0x118] sm:$0xf]
    %v2163 = vld [vmem:[%s3 + $0x11c] sm:$0xf]
    %v2164 = vld [vmem:[%s3 + $0x120] sm:$0xf]
    %v2165 = vld [vmem:[%s3 + $0x124] sm:$0xf]
    %v2166 = vld [vmem:[%s3 + $0x128] sm:$0xf]
    %v2167 = vld [vmem:[%s3 + $0x12c] sm:$0xf]
    %v2168 = vld [vmem:[%s3 + $0x130] sm:$0xf]
    %v2169 = vld [vmem:[%s3 + $0x134] sm:$0xf]
    %v2170 = vld [vmem:[%s3 + $0x138] sm:$0xf]
    %v2171 = vld [vmem:[%s3 + $0x13c] sm:$0xf]
    %v2172 = vld [vmem:[%s3 + $0x140] sm:$0xf]
    %v2173 = vld [vmem:[%s3 + $0x144] sm:$0xf]
    %v2174 = vld [vmem:[%s3 + $0x148] sm:$0xf]
    %v2175 = vld [vmem:[%s3 + $0x14c] sm:$0xf]
    %v2176 = vld [vmem:[%s3 + $0x150] sm:$0xf]
    %v2177 = vld [vmem:[%s3 + $0x154] sm:$0xf]
    %v2178 = vld [vmem:[%s3 + $0x158] sm:$0xf]
    %v2179 = vld [vmem:[%s3 + $0x15c] sm:$0xf]
    %v2180 = vld [vmem:[%s3 + $0x160] sm:$0xf]
    %v2181 = vld [vmem:[%s3 + $0x164] sm:$0xf]
    %v2182 = vld [vmem:[%s3 + $0x168] sm:$0xf]
    %v2183 = vld [vmem:[%s3 + $0x16c] sm:$0xf]
    %v2184 = vld [vmem:[%s3 + $0x170] sm:$0xf]
    %v2185 = vld [vmem:[%s3 + $0x174] sm:$0xf]
    %v2186 = vld [vmem:[%s3 + $0x178] sm:$0xf]
    %v2187 = vld [vmem:[%s3 + $0x17c] sm:$0xf]
    %v2236 = vunpack.c.l.b16 %v2140
    %v2237 = vunpack.c.l.b16 %v2141
    %v2238 = vunpack.c.l.b16 %v2142
    %v2239 = vunpack.c.l.b16 %v2143
    %v2240 = vunpack.c.l.b16 %v2144
    %v2241 = vunpack.c.l.b16 %v2145
    %v2242 = vunpack.c.l.b16 %v2146
    %v2243 = vunpack.c.l.b16 %v2147
    %v2244 = vunpack.c.l.b16 %v2148
    %v2245 = vunpack.c.l.b16 %v2149
    %v2246 = vunpack.c.l.b16 %v2150
    %v2247 = vunpack.c.l.b16 %v2151
    %v2248 = vunpack.c.l.b16 %v2152
    %v2249 = vunpack.c.l.b16 %v2153
    %v2250 = vunpack.c.l.b16 %v2154
    %v2251 = vunpack.c.l.b16 %v2155
    %v2252 = vunpack.c.l.b16 %v2156
    %v2253 = vunpack.c.l.b16 %v2157
    %v2254 = vunpack.c.l.b16 %v2158
    %v2255 = vunpack.c.l.b16 %v2159
    %v2256 = vunpack.c.l.b16 %v2160
    %v2257 = vunpack.c.l.b16 %v2161
    %v2258 = vunpack.c.l.b16 %v2162
    %v2259 = vunpack.c.l.b16 %v2163
    %v2260 = vunpack.c.l.b16 %v2164
    %v2261 = vunpack.c.l.b16 %v2165
    %v2262 = vunpack.c.l.b16 %v2166
    %v2263 = vunpack.c.l.b16 %v2167
    %v2264 = vunpack.c.l.b16 %v2168
    %v2265 = vunpack.c.l.b16 %v2169
    %v2266 = vunpack.c.l.b16 %v2170
    %v2267 = vunpack.c.l.b16 %v2171
    %v2268 = vunpack.c.l.b16 %v2172
    %v2269 = vunpack.c.l.b16 %v2173
    %v2270 = vunpack.c.l.b16 %v2174
    %v2271 = vunpack.c.l.b16 %v2175
    %v2272 = vunpack.c.l.b16 %v2176
    %v2273 = vunpack.c.l.b16 %v2177
    %v2274 = vunpack.c.l.b16 %v2178
    %v2275 = vunpack.c.l.b16 %v2179
    %v2276 = vunpack.c.l.b16 %v2180
    %v2277 = vunpack.c.l.b16 %v2181
    %v2278 = vunpack.c.l.b16 %v2182
    %v2279 = vunpack.c.l.b16 %v2183
    %v2280 = vunpack.c.l.b16 %v2184
    %v2281 = vunpack.c.l.b16 %v2185
    %v2282 = vunpack.c.l.b16 %v2186
    %v2283 = vunpack.c.l.b16 %v2187
    %v2284 = vpack.c.b16 %v2237, %v2236
    %v2285 = vpack.c.b16 %v2239, %v2238
    %v2286 = vpack.c.b16 %v2241, %v2240
    %v2287 = vpack.c.b16 %v2243, %v2242
    %v2288 = vpack.c.b16 %v2245, %v2244
    %v2289 = vpack.c.b16 %v2247, %v2246
    %v2290 = vpack.c.b16 %v2249, %v2248
    %v2291 = vpack.c.b16 %v2251, %v2250
    %v2292 = vpack.c.b16 %v2253, %v2252
    %v2293 = vpack.c.b16 %v2255, %v2254
    %v2294 = vpack.c.b16 %v2257, %v2256
    %v2295 = vpack.c.b16 %v2259, %v2258
    %v2296 = vpack.c.b16 %v2261, %v2260
    %v2297 = vpack.c.b16 %v2263, %v2262
    %v2298 = vpack.c.b16 %v2265, %v2264
    %v2299 = vpack.c.b16 %v2267, %v2266
    %v2300 = vpack.c.b16 %v2269, %v2268
    %v2301 = vpack.c.b16 %v2271, %v2270
    %v2302 = vpack.c.b16 %v2273, %v2272
    %v2303 = vpack.c.b16 %v2275, %v2274
    %v2304 = vpack.c.b16 %v2277, %v2276
    %v2305 = vpack.c.b16 %v2279, %v2278
    %v2306 = vpack.c.b16 %v2281, %v2280
    %v2307 = vpack.c.b16 %v2283, %v2282
    %2332 = vmatprep.subr.bf16.mxu0 0
    %2333 = vmatpush1.bf16.msra.mxu0 %v2284
    %2334 = vmatprep.subr.bf16.mxu0 0
    %2335 = vmatpush1.bf16.msra.mxu0 %v2285
    %2336 = vmatprep.subr.bf16.mxu0 0
    %2337 = vmatpush1.bf16.msra.mxu0 %v2286
    %2338 = vmatprep.subr.bf16.mxu0 0
    %2339 = vmatpush1.bf16.msra.mxu0 %v2287
    %2340 = vmatprep.subr.bf16.mxu0 0
    %2341 = vmatpush1.bf16.msra.mxu0 %v2288
    %2342 = vmatprep.subr.bf16.mxu0 0
    %2343 = vmatpush1.bf16.msra.mxu0 %v2289
    %2344 = vmatprep.subr.bf16.mxu0 0
    %2345 = vmatpush1.bf16.msra.mxu0 %v2290
    %2346 = vmatprep.subr.bf16.mxu0 0
    %2347 = vmatpush1.bf16.msra.mxu0 %v2291
    %2348 = vmatprep.subr.bf16.mxu0 0
    %2349 = vmatpush1.bf16.msra.mxu0 %v2292
    %2350 = vmatprep.subr.bf16.mxu0 0
    %2351 = vmatpush1.bf16.msra.mxu0 %v2293
    %2352 = vmatprep.subr.bf16.mxu0 0
    %2353 = vmatpush1.bf16.msra.mxu0 %v2294
    %2354 = vmatprep.subr.bf16.mxu0 0
    %2355 = vmatpush1.bf16.msra.mxu0 %v2295
    %2356 = vmatprep.subr.bf16.mxu0 0
    %2357 = vmatpush1.bf16.msra.mxu0 %v2296
    %2358 = vmatprep.subr.bf16.mxu0 0
    %2359 = vmatpush1.bf16.msra.mxu0 %v2297
    %2360 = vmatprep.subr.bf16.mxu0 0
    %2361 = vmatpush1.bf16.msra.mxu0 %v2298
    %2362 = vmatprep.subr.bf16.mxu0 0
    %2363 = vmatpush1.bf16.msra.mxu0 %v2299
    %2364 = vmatprep.mubr.bf16.mxu0 %v2138
    %2365 = vmatmul.mubr.bf16.gmra.mrb[0].mxu0 %v2137
    %v2366 = vpop.f32.mrb[0].mxu0
    %v2367 = vadd.f32 0.0, %v2366
    %v2368 = vpop.f32.mrb[0].mxu0
    %v2369 = vpop.f32.mrb[0].mxu0
    %v2370 = vadd.f32 0.0, %v2369
    %v2371 = vpop.f32.mrb[0].mxu0
    %2372 = vdwg.mxu0
    %2373 = vmatprep.subr.bf16.mxu0 0
    %2374 = vmatpush1.bf16.msra.mxu0 %v2300
    %2375 = vmatprep.subr.bf16.mxu0 0
    %2376 = vmatpush1.bf16.msra.mxu0 %v2301
    %2377 = vmatprep.subr.bf16.mxu0 0
    %2378 = vmatpush1.bf16.msra.mxu0 %v2302
    %2379 = vmatprep.subr.bf16.mxu0 0
    %2380 = vmatpush1.bf16.msra.mxu0 %v2303
    %2381 = vmatprep.subr.bf16.mxu0 0
    %2382 = vmatpush1.bf16.msra.mxu0 %v2304
    %2383 = vmatprep.subr.bf16.mxu0 0
    %2384 = vmatpush1.bf16.msra.mxu0 %v2305
    %2385 = vmatprep.subr.bf16.mxu0 0
    %2386 = vmatpush1.bf16.msra.mxu0 %v2306
    %2387 = vmatprep.subr.bf16.mxu0 0
    %2388 = vmatpush1.bf16.msra.mxu0 %v2307
    %2389 = vmatprep.subr.bf16.mxu0 0
    %2390 = vmatpush1.bf16.msra.mxu0 0
    %2391 = vmatprep.subr.bf16.mxu0 0
    %2392 = vmatpush1.bf16.msra.mxu0 0
    %2393 = vmatprep.subr.bf16.mxu0 0
    %2394 = vmatpush1.bf16.msra.mxu0 0
    %2395 = vmatprep.subr.bf16.mxu0 0
    %2396 = vmatpush1.bf16.msra.mxu0 0
    %2397 = vmatprep.subr.bf16.mxu0 0
    %2398 = vmatpush1.bf16.msra.mxu0 0
    %2399 = vmatprep.subr.bf16.mxu0 0
    %2400 = vmatpush1.bf16.msra.mxu0 0
    %2401 = vmatprep.subr.bf16.mxu0 0
    %2402 = vmatpush1.bf16.msra.mxu0 0
    %2403 = vmatprep.subr.bf16.mxu0 0
    %2404 = vmatpush1.bf16.msra.mxu0 0
    %2405 = vmatprep.mubr.bf16.mxu0 0
    %2406 = vmatmul.mubr.bf16.gmra.mrb[0].mxu0 %v2139
    %v2407 = vpop.f32.mrb[0].mxu0
    %v2408 = vadd.f32 %v2367, %v2407
    %v2409 = vpop.f32.mrb[0].mxu0
    %v2410 = vpop.f32.mrb[0].mxu0
    %v2411 = vadd.f32 %v2370, %v2410
    %v2412 = vpop.f32.mrb[0].mxu0
    %2413 = vdwg.mxu0
    %v2462 = vunpack.c.l.b16 %v2089
    %v2463 = vunpack.c.l.b16 %v2090
    %v2464 = vunpack.c.l.b16 %v2091
    %v2465 = vunpack.c.l.b16 %v2092
    %v2466 = vunpack.c.l.b16 %v2093
    %v2467 = vunpack.c.l.b16 %v2094
    %v2468 = vunpack.c.l.b16 %v2095
    %v2469 = vunpack.c.l.b16 %v2096
    %v2470 = vunpack.c.l.b16 %v2097
    %v2471 = vunpack.c.l.b16 %v2098
    %v2472 = vunpack.c.l.b16 %v2099
    %v2473 = vunpack.c.l.b16 %v2100
    %v2474 = vunpack.c.l.b16 %v2101
    %v2475 = vunpack.c.l.b16 %v2102
    %v2476 = vunpack.c.l.b16 %v2103
    %v2477 = vunpack.c.l.b16 %v2104
    %v2478 = vunpack.c.l.b16 %v2105
    %v2479 = vunpack.c.l.b16 %v2106
    %v2480 = vunpack.c.l.b16 %v2107
    %v2481 = vunpack.c.l.b16 %v2108
    %v2482 = vunpack.c.l.b16 %v2109
    %v2483 = vunpack.c.l.b16 %v2110
    %v2484 = vunpack.c.l.b16 %v2111
    %v2485 = vunpack.c.l.b16 %v2112
    %v2486 = vunpack.c.l.b16 %v2113
    %v2487 = vunpack.c.l.b16 %v2114
    %v2488 = vunpack.c.l.b16 %v2115
    %v2489 = vunpack.c.l.b16 %v2116
    %v2490 = vunpack.c.l.b16 %v2117
    %v2491 = vunpack.c.l.b16 %v2118
    %v2492 = vunpack.c.l.b16 %v2119
    %v2493 = vunpack.c.l.b16 %v2120
    %v2494 = vunpack.c.l.b16 %v2121
    %v2495 = vunpack.c.l.b16 %v2122
    %v2496 = vunpack.c.l.b16 %v2123
    %v2497 = vunpack.c.l.b16 %v2124
    %v2498 = vunpack.c.l.b16 %v2125
    %v2499 = vunpack.c.l.b16 %v2126
    %v2500 = vunpack.c.l.b16 %v2127
    %v2501 = vunpack.c.l.b16 %v2128
    %v2502 = vunpack.c.l.b16 %v2129
    %v2503 = vunpack.c.l.b16 %v2130
    %v2504 = vunpack.c.l.b16 %v2131
    %v2505 = vunpack.c.l.b16 %v2132
    %v2506 = vunpack.c.l.b16 %v2133
    %v2507 = vunpack.c.l.b16 %v2134
    %v2508 = vunpack.c.l.b16 %v2135
    %v2509 = vunpack.c.l.b16 %v2136
    %v2510 = vpack.c.b16 %v2463, %v2462
    %v2511 = vpack.c.b16 %v2465, %v2464
    %v2512 = vpack.c.b16 %v2467, %v2466
    %v2513 = vpack.c.b16 %v2469, %v2468
    %v2514 = vpack.c.b16 %v2471, %v2470
    %v2515 = vpack.c.b16 %v2473, %v2472
    %v2516 = vpack.c.b16 %v2475, %v2474
    %v2517 = vpack.c.b16 %v2477, %v2476
    %v2518 = vpack.c.b16 %v2479, %v2478
    %v2519 = vpack.c.b16 %v2481, %v2480
    %v2520 = vpack.c.b16 %v2483, %v2482
    %v2521 = vpack.c.b16 %v2485, %v2484
    %v2522 = vpack.c.b16 %v2487, %v2486
    %v2523 = vpack.c.b16 %v2489, %v2488
    %v2524 = vpack.c.b16 %v2491, %v2490
    %v2525 = vpack.c.b16 %v2493, %v2492
    %v2526 = vpack.c.b16 %v2495, %v2494
    %v2527 = vpack.c.b16 %v2497, %v2496
    %v2528 = vpack.c.b16 %v2499, %v2498
    %v2529 = vpack.c.b16 %v2501, %v2500
    %v2530 = vpack.c.b16 %v2503, %v2502
    %v2531 = vpack.c.b16 %v2505, %v2504
    %v2532 = vpack.c.b16 %v2507, %v2506
    %v2533 = vpack.c.b16 %v2509, %v2508
    %2558 = vmatprep.subr.bf16.mxu0 0
    %2559 = vmatpush1.bf16.msra.mxu0 %v2510
    %2560 = vmatprep.subr.bf16.mxu0 0
    %2561 = vmatpush1.bf16.msra.mxu0 %v2511
    %2562 = vmatprep.subr.bf16.mxu0 0
    %2563 = vmatpush1.bf16.msra.mxu0 %v2512
    %2564 = vmatprep.subr.bf16.mxu0 0
    %2565 = vmatpush1.bf16.msra.mxu0 %v2513
    %2566 = vmatprep.subr.bf16.mxu0 0
    %2567 = vmatpush1.bf16.msra.mxu0 %v2514
    %2568 = vmatprep.subr.bf16.mxu0 0
    %2569 = vmatpush1.bf16.msra.mxu0 %v2515
    %2570 = vmatprep.subr.bf16.mxu0 0
    %2571 = vmatpush1.bf16.msra.mxu0 %v2516
    %2572 = vmatprep.subr.bf16.mxu0 0
    %2573 = vmatpush1.bf16.msra.mxu0 %v2517
    %2574 = vmatprep.subr.bf16.mxu0 0
    %2575 = vmatpush1.bf16.msra.mxu0 %v2518
    %2576 = vmatprep.subr.bf16.mxu0 0
    %2577 = vmatpush1.bf16.msra.mxu0 %v2519
    %2578 = vmatprep.subr.bf16.mxu0 0
    %2579 = vmatpush1.bf16.msra.mxu0 %v2520
    %2580 = vmatprep.subr.bf16.mxu0 0
    %2581 = vmatpush1.bf16.msra.mxu0 %v2521
    %2582 = vmatprep.subr.bf16.mxu0 0
    %2583 = vmatpush1.bf16.msra.mxu0 %v2522
    %2584 = vmatprep.subr.bf16.mxu0 0
    %2585 = vmatpush1.bf16.msra.mxu0 %v2523
    %2586 = vmatprep.subr.bf16.mxu0 0
    %2587 = vmatpush1.bf16.msra.mxu0 %v2524
    %2588 = vmatprep.subr.bf16.mxu0 0
    %2589 = vmatpush1.bf16.msra.mxu0 %v2525
    %2590 = vmatprep.mubr.bf16.mxu0 %v2087
    %2591 = vmatmul.mubr.bf16.gmra.mrb[0].mxu0 %v2086
    %v2592 = vpop.f32.mrb[0].mxu0
    %v2593 = vadd.f32 %v2408, %v2592
    %v2594 = vpop.f32.mrb[0].mxu0
    %v2595 = vpop.f32.mrb[0].mxu0
    %v2596 = vadd.f32 %v2411, %v2595
    %v2597 = vpop.f32.mrb[0].mxu0
    %2598 = vdwg.mxu0
    %2599 = vmatprep.subr.bf16.mxu0 0
    %2600 = vmatpush1.bf16.msra.mxu0 %v2526
    %2601 = vmatprep.subr.bf16.mxu0 0
    %2602 = vmatpush1.bf16.msra.mxu0 %v2527
    %2603 = vmatprep.subr.bf16.mxu0 0
    %2604 = vmatpush1.bf16.msra.mxu0 %v2528
    %2605 = vmatprep.subr.bf16.mxu0 0
    %2606 = vmatpush1.bf16.msra.mxu0 %v2529
    %2607 = vmatprep.subr.bf16.mxu0 0
    %2608 = vmatpush1.bf16.msra.mxu0 %v2530
    %2609 = vmatprep.subr.bf16.mxu0 0
    %2610 = vmatpush1.bf16.msra.mxu0 %v2531
    %2611 = vmatprep.subr.bf16.mxu0 0
    %2612 = vmatpush1.bf16.msra.mxu0 %v2532
    %2613 = vmatprep.subr.bf16.mxu0 0
    %2614 = vmatpush1.bf16.msra.mxu0 %v2533
    %2615 = vmatprep.subr.bf16.mxu0 0
    %2616 = vmatpush1.bf16.msra.mxu0 0
    %2617 = vmatprep.subr.bf16.mxu0 0
    %2618 = vmatpush1.bf16.msra.mxu0 0
    %2619 = vmatprep.subr.bf16.mxu0 0
    %2620 = vmatpush1.bf16.msra.mxu0 0
    %2621 = vmatprep.subr.bf16.mxu0 0
    %2622 = vmatpush1.bf16.msra.mxu0 0
    %2623 = vmatprep.subr.bf16.mxu0 0
    %2624 = vmatpush1.bf16.msra.mxu0 0
    %2625 = vmatprep.subr.bf16.mxu0 0
    %2626 = vmatpush1.bf16.msra.mxu0 0
    %2627 = vmatprep.subr.bf16.mxu0 0
    %2628 = vmatpush1.bf16.msra.mxu0 0
    %2629 = vmatprep.subr.bf16.mxu0 0
    %2630 = vmatpush1.bf16.msra.mxu0 0
    %2631 = vmatprep.mubr.bf16.mxu0 0
    %2632 = vmatmul.mubr.bf16.gmra.mrb[0].mxu0 %v2088
    %v2633 = vpop.f32.mrb[0].mxu0
    %v2634 = vadd.f32 %v2593, %v2633
    %v2635 = vpop.f32.mrb[0].mxu0
    %v2636 = vpop.f32.mrb[0].mxu0
    %v2637 = vadd.f32 %v2596, %v2636
    %v2638 = vpop.f32.mrb[0].mxu0
    %2639 = vdwg.mxu0
    %v2640 = vld [vmem:[%s4 + $0xe] sm:$0x1]
    %v2642 = vlaneseq
    %v2643 = vshrl.u32 %v2642, 7
    %v2644 = vsub.s32 0, %v2643
    %v2645 = vrot.slane %v2640, %v2644
    %v2647 = vadd.f32 %v2634, %v2645
    %v2648 = vadd.f32 %v2637, %v2645
    %vm2649 = vcmask 31744
    %2650 = vst.msk [vmem:[%s5] sm:$0xff] %vm2649, %v2647
    %2651 = vst.msk [vmem:[%s5 + $0x8] sm:$0xff] %vm2649, %v2648
    // Predicated region
    $region26: #{tpu_custom_call.1} parent=1 // pred_check
      _
    $region27: #{tpu_custom_call.1} parent=1 // pred_check_branch
      %2653 = sbr.rel (0) target = $region29
    $region28: #{tpu_custom_call.1} parent=1 // pred_region
      _
    $region29: #{tpu_custom_call.1} parent=1 // pred_fallthru
      _
    // Predicated region
    $region30: #{tpu_custom_call.1} parent=1 // pred_check
      _
    $region31: #{tpu_custom_call.1} parent=1 // pred_check_branch
      %2655 = sbr.rel (0) target = $region33
    $region32: #{tpu_custom_call.1} parent=1 // pred_region
      _
    $region33: #{tpu_custom_call.1} parent=1 // pred_fallthru
      _
    %2656 = vsyncpa [#allocation3], 1

</llo_original>
